<compile_context>
chip_gen: v7x
topology: tpu7x:2x2x1
jax: 0.10.0
libtpu: 0.0.40
codegen_flags: <defaults>
</compile_context>

<pallas_src>
import math
import functools

import jax
import jax.numpy as jnp
from jax.experimental import pallas as pl
from jax.experimental.pallas import tpu as pltpu


# ----------------------------------------------------------------------------
# Pallas kernel
# ----------------------------------------------------------------------------
def _cross_att_kernel(
    x_ref, pf_ref,
    wq_ref, wkv_ref, wc_ref, w1_ref, w2_ref, vec_ref,
    o_ref,
    *, bt: int, l: int, l2: int, c: int, heads: int, dim_head: int,
    ffn: int, scale: float, eps: float = 1e-5,
):
    f32 = jnp.float32
    bf16 = jnp.bfloat16
    inv_c = 1.0 / c

    # --- unpack the single packed vector-parameter block (static slices) ---
    vec = vec_ref[...]                    # (9, maxw) f32
    bq = vec[0:1, 0:c]
    bkv = vec[1:2, 0:2 * c]
    bc = vec[2:3, 0:c]
    b1 = vec[3:4, 0:ffn]
    b2 = vec[4:5, 0:c]
    g1 = vec[5:6, 0:c]
    be1 = vec[6:7, 0:c]
    g2 = vec[7:8, 0:c]
    be2 = vec[8:9, 0:c]

    x = x_ref[...]                        # (bt*l,  c) f32  -- batch folded into rows
    pf = pf_ref[...]                      # (bt*l2, c) f32
    xb = x.astype(bf16)
    pfb = pf.astype(bf16)

    # --- fused-batch projections on the MXU (bf16 in, f32 accumulate) ---
    q = jnp.dot(xb, wq_ref[...], preferred_element_type=f32) + bq
    q = q * scale                         # single full-width scale
    kv = jnp.dot(pfb, wkv_ref[...], preferred_element_type=f32) + bkv   # fused K|V

    # leading-dim split only (minor dim unchanged -> cheap, layout-compatible)
    q3 = q.reshape(bt, l, c).astype(bf16)
    kv3 = kv.reshape(bt, l2, 2 * c).astype(bf16)

    # --- multi-head attention, each head batched over the bt batch dim -----
    # (per-head single-batch-dim einsums; see header for why the fully
    #  head-batched 'blhd,bmhd->bhlm' form was not used)
    outs = []
    for h in range(heads):
        lo = h * dim_head
        hi = lo + dim_head
        qh = q3[:, :, lo:hi]              # (bt, l,  dh)
        kh = kv3[:, :, lo:hi]             # (bt, l2, dh)   (K half of fused kv)
        vh = kv3[:, :, c + lo:c + hi]     # (bt, l2, dh)   (V half of fused kv)
        s = jnp.einsum('bld,bmd->blm', qh, kh,
                       preferred_element_type=f32)            # (bt, l, l2)
        s = s - jnp.max(s, axis=-1, keepdims=True)
        p = jnp.exp(s)
        p = p * pl.reciprocal(jnp.sum(p, axis=-1, keepdims=True), approx=True)
        outs.append(jnp.einsum('blm,bmd->bld', p.astype(bf16), vh,
                               preferred_element_type=f32))   # (bt, l, dh)
    att = jnp.concatenate(outs, axis=-1).reshape(bt * l, c)   # (bt*l, c) f32

    # --- output projection + residual + LayerNorm 1 (one-pass stats) -------
    x1 = x + jnp.dot(att.astype(bf16), wc_ref[...],
                     preferred_element_type=f32) + bc
    m1 = jnp.sum(x1, axis=-1, keepdims=True) * inv_c          # E[x]
    e1 = jnp.sum(x1 * x1, axis=-1, keepdims=True) * inv_c     # E[x^2] (independent reduce)
    var1 = e1 - m1 * m1
    x1 = (x1 - m1) * jax.lax.rsqrt(var1 + eps) * g1 + be1

    # --- FFN (Linear -> ReLU -> Linear) + residual + LayerNorm 2 -----------
    hdn = jnp.dot(x1.astype(bf16), w1_ref[...],
                  preferred_element_type=f32) + b1
    hdn = jnp.maximum(hdn, 0.0)
    x2 = x1 + jnp.dot(hdn.astype(bf16), w2_ref[...],
                      preferred_element_type=f32) + b2
    m2 = jnp.sum(x2, axis=-1, keepdims=True) * inv_c
    e2 = jnp.sum(x2 * x2, axis=-1, keepdims=True) * inv_c
    var2 = e2 - m2 * m2
    x2 = (x2 - m2) * jax.lax.rsqrt(var2 + eps) * g2 + be2

    o_ref[...] = x2.astype(o_ref.dtype)


# ----------------------------------------------------------------------------
# Wrapper
# ----------------------------------------------------------------------------
def _pick_batch_block(b, l, l2, target_rows=2048, max_rows=8192, min_steps=2):
    """Largest divisor of b with bt*l <= max_rows, keeping >= min_steps grid
    steps when possible (v7x: 2 TensorCores), preferring the first bt that
    reaches target_rows (fills the MXU M dimension / amortizes step overhead).
    Also keeps block row-counts 8-aligned for the (8,128) BlockSpec rule."""
    best = None
    for bt in range(1, b + 1):
        if b % bt:
            continue
        if (b // bt) < min_steps and b >= min_steps:
            continue
        if bt * l > max_rows:
            continue
        ok_x = (bt * l) % 8 == 0 or bt == b
        ok_p = (bt * l2) % 8 == 0 or bt == b
        if not (ok_x and ok_p):
            continue
        best = bt
        if bt * l >= target_rows:
            break
    if best is None:
        best = b          # full-array block always satisfies the full-dim rule
    return best


def cross_att_layer(x, part_fea, params, *, heads, batch_block=None):
    """x: (B, L, C), part_fea: (B, L2, C).  params: dict of kernel weights."""
    b, l, c = x.shape
    l2 = part_fea.shape[1]
    dim_head = c // heads
    scale = dim_head ** (-0.5)
    ffn = params["w1"].shape[1]

    bt = _pick_batch_block(b, l, l2) if batch_block is None else batch_block
    assert b % bt == 0, "batch block must divide batch"
    grid = (b // bt,)

    # Fold batch into the matmul M dimension (contiguous collapse -> free).
    x2d = x.reshape(b * l, c)
    pf2d = part_fea.reshape(b * l2, c)

    bf16 = jnp.bfloat16
    wq = params["wq"].astype(bf16)                                      # (c, c)
    wkv = jnp.concatenate([params["wk"], params["wv"]], axis=1).astype(bf16)  # (c, 2c)
    wc = params["wc"].astype(bf16)                                      # (c, c)
    w1 = params["w1"].astype(bf16)                                      # (c, ffn)
    w2 = params["w2"].astype(bf16)                                      # (ffn, c)

    # Pack the 9 small vectors (biases / LN gamma & beta) into ONE input.
    maxw = max(2 * c, ffn)

    def _row(v):
        v = v.reshape(1, -1).astype(jnp.float32)
        return jnp.pad(v, ((0, 0), (0, maxw - v.shape[-1])))

    vecs = jnp.concatenate([
        _row(params["bq"]),                                              # row 0
        _row(jnp.concatenate([params["bk"], params["bv"]], axis=-1)),    # row 1 (bk|bv)
        _row(params["bc"]),                                              # row 2
        _row(params["b1"]),                                              # row 3
        _row(params["b2"]),                                              # row 4
        _row(params["g1"]),                                              # row 5
        _row(params["be1"]),                                             # row 6
        _row(params["g2"]),                                              # row 7
        _row(params["be2"]),                                             # row 8
    ], axis=0)                                                           # (9, maxw)

    in_specs = [
        pl.BlockSpec((bt * l, c), lambda i: (i, 0)),        # x   (rows blocked)
        pl.BlockSpec((bt * l2, c), lambda i: (i, 0)),       # part_fea
        pl.BlockSpec((c, c), lambda i: (0, 0)),             # wq
        pl.BlockSpec((c, 2 * c), lambda i: (0, 0)),         # wkv (fused)
        pl.BlockSpec((c, c), lambda i: (0, 0)),             # wc
        pl.BlockSpec((c, ffn), lambda i: (0, 0)),           # w1
        pl.BlockSpec((ffn, c), lambda i: (0, 0)),           # w2
        pl.BlockSpec((9, maxw), lambda i: (0, 0)),          # packed vectors
    ]
    out_spec = pl.BlockSpec((bt * l, c), lambda i: (i, 0))

    # Advisory cost estimate so XLA schedules around the custom call.
    flops = 2 * b * (l * c * c            # q proj
                     + l2 * c * 2 * c     # fused k|v proj
                     + 2 * l * l2 * c     # scores + att@v (summed over heads)
                     + l * c * c          # output proj
                     + 2 * l * c * ffn)   # FFN
    transcendentals = b * (heads * l * l2 + heads * l + 2 * l)
    bytes_accessed = 4 * (x2d.size + pf2d.size + b * l * c + vecs.size) + sum(
        int(w.size) * 2 for w in (wq, wkv, wc, w1, w2))

    kernel = functools.partial(
        _cross_att_kernel, bt=bt, l=l, l2=l2, c=c, heads=heads,
        dim_head=dim_head, ffn=ffn, scale=scale)

    out = pl.pallas_call(
        kernel,
        out_shape=jax.ShapeDtypeStruct((b * l, c), x.dtype),
        grid_spec=pltpu.PrefetchScalarGridSpec(
            num_scalar_prefetch=0,
            grid=grid,
            in_specs=in_specs,
            out_specs=out_spec,
        ),
        compiler_params=pltpu.CompilerParams(
            dimension_semantics=("parallel",)),
        cost_estimate=pl.CostEstimate(
            flops=int(flops),
            transcendentals=int(transcendentals),
            bytes_accessed=int(bytes_accessed)),
    )(x2d, pf2d, wq, wkv, wc, w1, w2, vecs)

    return out.reshape(b, l, c)


# ----------------------------------------------------------------------------
# Pure-JAX reference (mirrors the PyTorch forward exactly, all f32)
# ----------------------------------------------------------------------------
def cross_att_layer_ref(x, part_fea, params, *, heads):
    b, l, c = x.shape
    l2 = part_fea.shape[1]
    dh = c // heads
    scale = dh ** (-0.5)
    eps = 1e-5

    q = x @ params["wq"] + params["bq"]
    k = part_fea @ params["wk"] + params["bk"]
    v = part_fea @ params["wv"] + params["bv"]
    q = q.reshape(b, l, heads, dh).transpose(0, 2, 1, 3) * scale
    k = k.reshape(b, l2, heads, dh).transpose(0, 2, 1, 3)
    v = v.reshape(b, l2, heads, dh).transpose(0, 2, 1, 3)
    att = jax.nn.softmax(q @ k.transpose(0, 1, 3, 2), axis=-1)
    o = (att @ v).transpose(0, 2, 1, 3).reshape(b, l, c)
    x = x + o @ params["wc"] + params["bc"]

    def ln(z, g, be):
        mu = jnp.mean(z, -1, keepdims=True)
        var = jnp.mean((z - mu) ** 2, -1, keepdims=True)
        return (z - mu) * jax.lax.rsqrt(var + eps) * g + be

    x = ln(x, params["g1"], params["be1"])
    h = jnp.maximum(x @ params["w1"] + params["b1"], 0.0)
    x = x + h @ params["w2"] + params["b2"]
    x = ln(x, params["g2"], params["be2"])
    return x


# ----------------------------------------------------------------------------
# Deterministic parameter init (shapes follow the PyTorch __init__)
# ----------------------------------------------------------------------------
def init_params(key, dim, ffn_dim):
    ks = jax.random.split(key, 12)

    def lin(kw, kb, fan_in, fan_out):
        bound = 1.0 / math.sqrt(fan_in)
        # stored already transposed: (in, out) so kernel does x @ W + b
        w = jax.random.uniform(kw, (fan_in, fan_out), jnp.float32, -bound, bound)
        b = jax.random.uniform(kb, (1, fan_out), jnp.float32, -bound, bound)
        return w, b

    wq, bq = lin(ks[0], ks[1], dim, dim)
    wk, bk = lin(ks[2], ks[3], dim, dim)
    wv, bv = lin(ks[4], ks[5], dim, dim)
    wc, bc = lin(ks[6], ks[7], dim, dim)
    w1, b1 = lin(ks[8], ks[9], dim, ffn_dim)
    w2, b2 = lin(ks[10], ks[11], ffn_dim, dim)
    return {
        "wq": wq, "bq": bq, "wk": wk, "bk": bk, "wv": wv, "bv": bv,
        "wc": wc, "bc": bc, "w1": w1, "b1": b1, "w2": w2, "b2": b2,
        "g1": jnp.ones((1, dim), jnp.float32),
        "be1": jnp.zeros((1, dim), jnp.float32),
        "g2": jnp.ones((1, dim), jnp.float32),
        "be2": jnp.zeros((1, dim), jnp.float32),
    }


if __name__ == "__main__":
    B, L, L2 = 2, 16, 8
    DIM, HEADS, FFN_MUL = 32, 4, 2
    FFN_DIM = FFN_MUL * DIM

    key = jax.random.PRNGKey(0)
    kx, kp, kw = jax.random.split(key, 3)
    x = jax.random.normal(kx, (B, L, DIM), jnp.float32)
    part_fea = jax.random.normal(kp, (B, L2, DIM), jnp.float32)
    params = init_params(kw, DIM, FFN_DIM)

    out = cross_att_layer(x, part_fea, params, heads=HEADS)
    out = jax.block_until_ready(out)

    ref = cross_att_layer_ref(x, part_fea, params, heads=HEADS)
    assert out.shape == (B, L, DIM)
    # bf16 MXU inputs + approx reciprocal -> loosened tolerance vs f32 reference
    assert jnp.allclose(out, ref, atol=5e-2, rtol=5e-2), "mismatch vs reference"

    print("KERNEL_OK")
</pallas_src>

<mosaic_0001>
module attributes {stable_mosaic.version = 11 : i64} {
  func.func @_cross_att_kernel(%arg0: i32, %arg1: memref<16x32xf32, #tpu.memory_space<vmem>>, %arg2: memref<8x32xf32, #tpu.memory_space<vmem>>, %arg3: memref<32x32xbf16, #tpu.memory_space<vmem>>, %arg4: memref<32x64xbf16, #tpu.memory_space<vmem>>, %arg5: memref<32x32xbf16, #tpu.memory_space<vmem>>, %arg6: memref<32x64xbf16, #tpu.memory_space<vmem>>, %arg7: memref<64x32xbf16, #tpu.memory_space<vmem>>, %arg8: memref<9x64xf32, #tpu.memory_space<vmem>>, %arg9: memref<16x32xf32, #tpu.memory_space<vmem>>) attributes {dimension_semantics = [#tpu.dimension_semantics<parallel>], iteration_bounds = array<i64: 2>, scalar_prefetch = 0 : i64, scratch_operands = 0 : i64, tpu.core_type = #tpu.core_type<tc>, window_params = [{transform_indices = @transform_0, window_bounds = array<i64: 16, 32>}, {transform_indices = @transform_1, window_bounds = array<i64: 8, 32>}, {pipeline_mode = #tpu.pipeline_mode<synchronous>, transform_indices = @transform_2, window_bounds = array<i64: 32, 32>}, {pipeline_mode = #tpu.pipeline_mode<synchronous>, transform_indices = @transform_3, window_bounds = array<i64: 32, 64>}, {pipeline_mode = #tpu.pipeline_mode<synchronous>, transform_indices = @transform_4, window_bounds = array<i64: 32, 32>}, {pipeline_mode = #tpu.pipeline_mode<synchronous>, transform_indices = @transform_5, window_bounds = array<i64: 32, 64>}, {pipeline_mode = #tpu.pipeline_mode<synchronous>, transform_indices = @transform_6, window_bounds = array<i64: 64, 32>}, {pipeline_mode = #tpu.pipeline_mode<synchronous>, transform_indices = @transform_7, window_bounds = array<i64: 9, 64>}, {transform_indices = @transform_8, window_bounds = array<i64: 16, 32>}]} {
    %c0 = arith.constant 0 : index
    %c0_0 = arith.constant 0 : index
    %0 = vector.load %arg8[%c0, %c0_0] : memref<9x64xf32, #tpu.memory_space<vmem>>, vector<9x64xf32>
    %1 = vector.extract_strided_slice %0 {offsets = [0, 0], sizes = [1, 32], strides = [1, 1]} : vector<9x64xf32> to vector<1x32xf32>
    %2 = vector.extract_strided_slice %0 {offsets = [1, 0], sizes = [1, 64], strides = [1, 1]} : vector<9x64xf32> to vector<1x64xf32>
    %3 = vector.extract_strided_slice %0 {offsets = [2, 0], sizes = [1, 32], strides = [1, 1]} : vector<9x64xf32> to vector<1x32xf32>
    %4 = vector.extract_strided_slice %0 {offsets = [3, 0], sizes = [1, 64], strides = [1, 1]} : vector<9x64xf32> to vector<1x64xf32>
    %5 = vector.extract_strided_slice %0 {offsets = [4, 0], sizes = [1, 32], strides = [1, 1]} : vector<9x64xf32> to vector<1x32xf32>
    %6 = vector.extract_strided_slice %0 {offsets = [5, 0], sizes = [1, 32], strides = [1, 1]} : vector<9x64xf32> to vector<1x32xf32>
    %7 = vector.extract_strided_slice %0 {offsets = [6, 0], sizes = [1, 32], strides = [1, 1]} : vector<9x64xf32> to vector<1x32xf32>
    %8 = vector.extract_strided_slice %0 {offsets = [7, 0], sizes = [1, 32], strides = [1, 1]} : vector<9x64xf32> to vector<1x32xf32>
    %9 = vector.extract_strided_slice %0 {offsets = [8, 0], sizes = [1, 32], strides = [1, 1]} : vector<9x64xf32> to vector<1x32xf32>
    %c0_1 = arith.constant 0 : index
    %c0_2 = arith.constant 0 : index
    %10 = vector.load %arg1[%c0_1, %c0_2] : memref<16x32xf32, #tpu.memory_space<vmem>>, vector<16x32xf32>
    %c0_3 = arith.constant 0 : index
    %c0_4 = arith.constant 0 : index
    %11 = vector.load %arg2[%c0_3, %c0_4] : memref<8x32xf32, #tpu.memory_space<vmem>>, vector<8x32xf32>
    %12 = arith.truncf %10 : vector<16x32xf32> to vector<16x32xbf16>
    %13 = arith.truncf %11 : vector<8x32xf32> to vector<8x32xbf16>
    %c0_5 = arith.constant 0 : index
    %c0_6 = arith.constant 0 : index
    %14 = vector.load %arg3[%c0_5, %c0_6] : memref<32x32xbf16, #tpu.memory_space<vmem>>, vector<32x32xbf16>
    %cst = arith.constant dense<0.000000e+00> : vector<16x32xf32>
    %15 = tpu.matmul %12, %14, %cst {dimension_numbers = #tpu.dot_dimension_numbers<[1], [0], [0], [1], [0, 0, 1, 1], [], []>} : vector<16x32xbf16>, vector<32x32xbf16>, vector<16x32xf32> -> vector<16x32xf32>
    %16 = vector.broadcast %1 : vector<1x32xf32> to vector<16x32xf32>
    %17 = arith.addf %15, %16 : vector<16x32xf32>
    %cst_7 = arith.constant 0.353553385 : f32
    %18 = vector.broadcast %cst_7 : f32 to vector<16x32xf32>
    %19 = arith.mulf %17, %18 : vector<16x32xf32>
    %c0_8 = arith.constant 0 : index
    %c0_9 = arith.constant 0 : index
    %20 = vector.load %arg4[%c0_8, %c0_9] : memref<32x64xbf16, #tpu.memory_space<vmem>>, vector<32x64xbf16>
    %cst_10 = arith.constant dense<0.000000e+00> : vector<8x64xf32>
    %21 = tpu.matmul %13, %20, %cst_10 {dimension_numbers = #tpu.dot_dimension_numbers<[1], [0], [0], [1], [0, 0, 1, 1], [], []>} : vector<8x32xbf16>, vector<32x64xbf16>, vector<8x64xf32> -> vector<8x64xf32>
    %22 = vector.broadcast %2 : vector<1x64xf32> to vector<8x64xf32>
    %23 = arith.addf %21, %22 : vector<8x64xf32>
    %24 = vector.shape_cast %19 : vector<16x32xf32> to vector<1x16x32xf32>
    %25 = arith.truncf %24 : vector<1x16x32xf32> to vector<1x16x32xbf16>
    %26 = vector.shape_cast %23 : vector<8x64xf32> to vector<1x8x64xf32>
    %27 = arith.truncf %26 : vector<1x8x64xf32> to vector<1x8x64xbf16>
    %28 = vector.extract_strided_slice %25 {offsets = [0, 0, 0], sizes = [1, 16, 8], strides = [1, 1, 1]} : vector<1x16x32xbf16> to vector<1x16x8xbf16>
    %29 = vector.extract_strided_slice %27 {offsets = [0, 0, 0], sizes = [1, 8, 8], strides = [1, 1, 1]} : vector<1x8x64xbf16> to vector<1x8x8xbf16>
    %30 = vector.extract_strided_slice %27 {offsets = [0, 0, 32], sizes = [1, 8, 8], strides = [1, 1, 1]} : vector<1x8x64xbf16> to vector<1x8x8xbf16>
    "tpu.trace_start"() <{level = 10 : i32, message = "bld,bmd->blm"}> : () -> ()
    %cst_11 = arith.constant dense<0.000000e+00> : vector<1x16x8xf32>
    %31 = tpu.matmul %28, %29, %cst_11 {dimension_numbers = #tpu.dot_dimension_numbers<[2], [2], [1], [1], [0, 0, 0, 1, 1, 1], [0], [0]>} : vector<1x16x8xbf16>, vector<1x8x8xbf16>, vector<1x16x8xf32> -> vector<1x16x8xf32>
    "tpu.trace_stop"() : () -> ()
    %cst_12 = arith.constant dense<0xFF800000> : vector<1x16xf32>
    %32 = vector.multi_reduction <maximumf>, %31, %cst_12 [2] : vector<1x16x8xf32> to vector<1x16xf32>
    %33 = vector.shape_cast %32 : vector<1x16xf32> to vector<1x16x1xf32>
    %34 = vector.broadcast %33 : vector<1x16x1xf32> to vector<1x16x8xf32>
    %35 = arith.subf %31, %34 : vector<1x16x8xf32>
    %36 = math.exp %35 : vector<1x16x8xf32>
    %cst_13 = arith.constant dense<0.000000e+00> : vector<1x16xf32>
    %37 = vector.multi_reduction <add>, %36, %cst_13 [2] : vector<1x16x8xf32> to vector<1x16xf32>
    %38 = vector.shape_cast %37 : vector<1x16xf32> to vector<1x16x1xf32>
    %39 = tpu.reciprocal %38 {approx = true} : vector<1x16x1xf32> -> vector<1x16x1xf32>
    %40 = vector.broadcast %39 : vector<1x16x1xf32> to vector<1x16x8xf32>
    %41 = arith.mulf %36, %40 : vector<1x16x8xf32>
    %42 = arith.truncf %41 : vector<1x16x8xf32> to vector<1x16x8xbf16>
    "tpu.trace_start"() <{level = 10 : i32, message = "blm,bmd->bld"}> : () -> ()
    %cst_14 = arith.constant dense<0.000000e+00> : vector<1x16x8xf32>
    %43 = tpu.matmul %42, %30, %cst_14 {dimension_numbers = #tpu.dot_dimension_numbers<[2], [1], [1], [2], [0, 0, 0, 1, 1, 2], [0], [0]>} : vector<1x16x8xbf16>, vector<1x8x8xbf16>, vector<1x16x8xf32> -> vector<1x16x8xf32>
    "tpu.trace_stop"() : () -> ()
    %44 = vector.extract_strided_slice %25 {offsets = [0, 0, 8], sizes = [1, 16, 8], strides = [1, 1, 1]} : vector<1x16x32xbf16> to vector<1x16x8xbf16>
    %45 = vector.extract_strided_slice %27 {offsets = [0, 0, 8], sizes = [1, 8, 8], strides = [1, 1, 1]} : vector<1x8x64xbf16> to vector<1x8x8xbf16>
    %46 = vector.extract_strided_slice %27 {offsets = [0, 0, 40], sizes = [1, 8, 8], strides = [1, 1, 1]} : vector<1x8x64xbf16> to vector<1x8x8xbf16>
    "tpu.trace_start"() <{level = 10 : i32, message = "bld,bmd->blm"}> : () -> ()
    %cst_15 = arith.constant dense<0.000000e+00> : vector<1x16x8xf32>
    %47 = tpu.matmul %44, %45, %cst_15 {dimension_numbers = #tpu.dot_dimension_numbers<[2], [2], [1], [1], [0, 0, 0, 1, 1, 1], [0], [0]>} : vector<1x16x8xbf16>, vector<1x8x8xbf16>, vector<1x16x8xf32> -> vector<1x16x8xf32>
    "tpu.trace_stop"() : () -> ()
    %cst_16 = arith.constant dense<0xFF800000> : vector<1x16xf32>
    %48 = vector.multi_reduction <maximumf>, %47, %cst_16 [2] : vector<1x16x8xf32> to vector<1x16xf32>
    %49 = vector.shape_cast %48 : vector<1x16xf32> to vector<1x16x1xf32>
    %50 = vector.broadcast %49 : vector<1x16x1xf32> to vector<1x16x8xf32>
    %51 = arith.subf %47, %50 : vector<1x16x8xf32>
    %52 = math.exp %51 : vector<1x16x8xf32>
    %cst_17 = arith.constant dense<0.000000e+00> : vector<1x16xf32>
    %53 = vector.multi_reduction <add>, %52, %cst_17 [2] : vector<1x16x8xf32> to vector<1x16xf32>
    %54 = vector.shape_cast %53 : vector<1x16xf32> to vector<1x16x1xf32>
    %55 = tpu.reciprocal %54 {approx = true} : vector<1x16x1xf32> -> vector<1x16x1xf32>
    %56 = vector.broadcast %55 : vector<1x16x1xf32> to vector<1x16x8xf32>
    %57 = arith.mulf %52, %56 : vector<1x16x8xf32>
    %58 = arith.truncf %57 : vector<1x16x8xf32> to vector<1x16x8xbf16>
    "tpu.trace_start"() <{level = 10 : i32, message = "blm,bmd->bld"}> : () -> ()
    %cst_18 = arith.constant dense<0.000000e+00> : vector<1x16x8xf32>
    %59 = tpu.matmul %58, %46, %cst_18 {dimension_numbers = #tpu.dot_dimension_numbers<[2], [1], [1], [2], [0, 0, 0, 1, 1, 2], [0], [0]>} : vector<1x16x8xbf16>, vector<1x8x8xbf16>, vector<1x16x8xf32> -> vector<1x16x8xf32>
    "tpu.trace_stop"() : () -> ()
    %60 = vector.extract_strided_slice %25 {offsets = [0, 0, 16], sizes = [1, 16, 8], strides = [1, 1, 1]} : vector<1x16x32xbf16> to vector<1x16x8xbf16>
    %61 = vector.extract_strided_slice %27 {offsets = [0, 0, 16], sizes = [1, 8, 8], strides = [1, 1, 1]} : vector<1x8x64xbf16> to vector<1x8x8xbf16>
    %62 = vector.extract_strided_slice %27 {offsets = [0, 0, 48], sizes = [1, 8, 8], strides = [1, 1, 1]} : vector<1x8x64xbf16> to vector<1x8x8xbf16>
    "tpu.trace_start"() <{level = 10 : i32, message = "bld,bmd->blm"}> : () -> ()
    %cst_19 = arith.constant dense<0.000000e+00> : vector<1x16x8xf32>
    %63 = tpu.matmul %60, %61, %cst_19 {dimension_numbers = #tpu.dot_dimension_numbers<[2], [2], [1], [1], [0, 0, 0, 1, 1, 1], [0], [0]>} : vector<1x16x8xbf16>, vector<1x8x8xbf16>, vector<1x16x8xf32> -> vector<1x16x8xf32>
    "tpu.trace_stop"() : () -> ()
    %cst_20 = arith.constant dense<0xFF800000> : vector<1x16xf32>
    %64 = vector.multi_reduction <maximumf>, %63, %cst_20 [2] : vector<1x16x8xf32> to vector<1x16xf32>
    %65 = vector.shape_cast %64 : vector<1x16xf32> to vector<1x16x1xf32>
    %66 = vector.broadcast %65 : vector<1x16x1xf32> to vector<1x16x8xf32>
    %67 = arith.subf %63, %66 : vector<1x16x8xf32>
    %68 = math.exp %67 : vector<1x16x8xf32>
    %cst_21 = arith.constant dense<0.000000e+00> : vector<1x16xf32>
    %69 = vector.multi_reduction <add>, %68, %cst_21 [2] : vector<1x16x8xf32> to vector<1x16xf32>
    %70 = vector.shape_cast %69 : vector<1x16xf32> to vector<1x16x1xf32>
    %71 = tpu.reciprocal %70 {approx = true} : vector<1x16x1xf32> -> vector<1x16x1xf32>
    %72 = vector.broadcast %71 : vector<1x16x1xf32> to vector<1x16x8xf32>
    %73 = arith.mulf %68, %72 : vector<1x16x8xf32>
    %74 = arith.truncf %73 : vector<1x16x8xf32> to vector<1x16x8xbf16>
    "tpu.trace_start"() <{level = 10 : i32, message = "blm,bmd->bld"}> : () -> ()
    %cst_22 = arith.constant dense<0.000000e+00> : vector<1x16x8xf32>
    %75 = tpu.matmul %74, %62, %cst_22 {dimension_numbers = #tpu.dot_dimension_numbers<[2], [1], [1], [2], [0, 0, 0, 1, 1, 2], [0], [0]>} : vector<1x16x8xbf16>, vector<1x8x8xbf16>, vector<1x16x8xf32> -> vector<1x16x8xf32>
    "tpu.trace_stop"() : () -> ()
    %76 = vector.extract_strided_slice %25 {offsets = [0, 0, 24], sizes = [1, 16, 8], strides = [1, 1, 1]} : vector<1x16x32xbf16> to vector<1x16x8xbf16>
    %77 = vector.extract_strided_slice %27 {offsets = [0, 0, 24], sizes = [1, 8, 8], strides = [1, 1, 1]} : vector<1x8x64xbf16> to vector<1x8x8xbf16>
    %78 = vector.extract_strided_slice %27 {offsets = [0, 0, 56], sizes = [1, 8, 8], strides = [1, 1, 1]} : vector<1x8x64xbf16> to vector<1x8x8xbf16>
    "tpu.trace_start"() <{level = 10 : i32, message = "bld,bmd->blm"}> : () -> ()
    %cst_23 = arith.constant dense<0.000000e+00> : vector<1x16x8xf32>
    %79 = tpu.matmul %76, %77, %cst_23 {dimension_numbers = #tpu.dot_dimension_numbers<[2], [2], [1], [1], [0, 0, 0, 1, 1, 1], [0], [0]>} : vector<1x16x8xbf16>, vector<1x8x8xbf16>, vector<1x16x8xf32> -> vector<1x16x8xf32>
    "tpu.trace_stop"() : () -> ()
    %cst_24 = arith.constant dense<0xFF800000> : vector<1x16xf32>
    %80 = vector.multi_reduction <maximumf>, %79, %cst_24 [2] : vector<1x16x8xf32> to vector<1x16xf32>
    %81 = vector.shape_cast %80 : vector<1x16xf32> to vector<1x16x1xf32>
    %82 = vector.broadcast %81 : vector<1x16x1xf32> to vector<1x16x8xf32>
    %83 = arith.subf %79, %82 : vector<1x16x8xf32>
    %84 = math.exp %83 : vector<1x16x8xf32>
    %cst_25 = arith.constant dense<0.000000e+00> : vector<1x16xf32>
    %85 = vector.multi_reduction <add>, %84, %cst_25 [2] : vector<1x16x8xf32> to vector<1x16xf32>
    %86 = vector.shape_cast %85 : vector<1x16xf32> to vector<1x16x1xf32>
    %87 = tpu.reciprocal %86 {approx = true} : vector<1x16x1xf32> -> vector<1x16x1xf32>
    %88 = vector.broadcast %87 : vector<1x16x1xf32> to vector<1x16x8xf32>
    %89 = arith.mulf %84, %88 : vector<1x16x8xf32>
    %90 = arith.truncf %89 : vector<1x16x8xf32> to vector<1x16x8xbf16>
    "tpu.trace_start"() <{level = 10 : i32, message = "blm,bmd->bld"}> : () -> ()
    %cst_26 = arith.constant dense<0.000000e+00> : vector<1x16x8xf32>
    %91 = tpu.matmul %90, %78, %cst_26 {dimension_numbers = #tpu.dot_dimension_numbers<[2], [1], [1], [2], [0, 0, 0, 1, 1, 2], [0], [0]>} : vector<1x16x8xbf16>, vector<1x8x8xbf16>, vector<1x16x8xf32> -> vector<1x16x8xf32>
    "tpu.trace_stop"() : () -> ()
    %92 = tpu.concatenate %43, %59, %75, %91 in 2 : vector<1x16x8xf32>, vector<1x16x8xf32>, vector<1x16x8xf32>, vector<1x16x8xf32> -> vector<1x16x32xf32>
    %93 = vector.shape_cast %92 : vector<1x16x32xf32> to vector<16x32xf32>
    %94 = arith.truncf %93 : vector<16x32xf32> to vector<16x32xbf16>
    %c0_27 = arith.constant 0 : index
    %c0_28 = arith.constant 0 : index
    %95 = vector.load %arg5[%c0_27, %c0_28] : memref<32x32xbf16, #tpu.memory_space<vmem>>, vector<32x32xbf16>
    %cst_29 = arith.constant dense<0.000000e+00> : vector<16x32xf32>
    %96 = tpu.matmul %94, %95, %cst_29 {dimension_numbers = #tpu.dot_dimension_numbers<[1], [0], [0], [1], [0, 0, 1, 1], [], []>} : vector<16x32xbf16>, vector<32x32xbf16>, vector<16x32xf32> -> vector<16x32xf32>
    %97 = arith.addf %10, %96 : vector<16x32xf32>
    %98 = vector.broadcast %3 : vector<1x32xf32> to vector<16x32xf32>
    %99 = arith.addf %97, %98 : vector<16x32xf32>
    %cst_30 = arith.constant dense<0.000000e+00> : vector<16xf32>
    %100 = vector.multi_reduction <add>, %99, %cst_30 [1] : vector<16x32xf32> to vector<16xf32>
    %101 = vector.shape_cast %100 : vector<16xf32> to vector<16x1xf32>
    %cst_31 = arith.constant 3.125000e-02 : f32
    %102 = vector.broadcast %cst_31 : f32 to vector<16x1xf32>
    %103 = arith.mulf %101, %102 : vector<16x1xf32>
    %104 = arith.mulf %99, %99 : vector<16x32xf32>
    %cst_32 = arith.constant dense<0.000000e+00> : vector<16xf32>
    %105 = vector.multi_reduction <add>, %104, %cst_32 [1] : vector<16x32xf32> to vector<16xf32>
    %106 = vector.shape_cast %105 : vector<16xf32> to vector<16x1xf32>
    %cst_33 = arith.constant 3.125000e-02 : f32
    %107 = vector.broadcast %cst_33 : f32 to vector<16x1xf32>
    %108 = arith.mulf %106, %107 : vector<16x1xf32>
    %109 = arith.mulf %103, %103 : vector<16x1xf32>
    %110 = arith.subf %108, %109 : vector<16x1xf32>
    %111 = vector.broadcast %103 : vector<16x1xf32> to vector<16x32xf32>
    %112 = arith.subf %99, %111 : vector<16x32xf32>
    %cst_34 = arith.constant 9.99999974E-6 : f32
    %113 = vector.broadcast %cst_34 : f32 to vector<16x1xf32>
    %114 = arith.addf %110, %113 : vector<16x1xf32>
    %115 = math.rsqrt %114 : vector<16x1xf32>
    %116 = vector.broadcast %115 : vector<16x1xf32> to vector<16x32xf32>
    %117 = arith.mulf %112, %116 : vector<16x32xf32>
    %118 = vector.broadcast %6 : vector<1x32xf32> to vector<16x32xf32>
    %119 = arith.mulf %117, %118 : vector<16x32xf32>
    %120 = vector.broadcast %7 : vector<1x32xf32> to vector<16x32xf32>
    %121 = arith.addf %119, %120 : vector<16x32xf32>
    %122 = arith.truncf %121 : vector<16x32xf32> to vector<16x32xbf16>
    %c0_35 = arith.constant 0 : index
    %c0_36 = arith.constant 0 : index
    %123 = vector.load %arg6[%c0_35, %c0_36] : memref<32x64xbf16, #tpu.memory_space<vmem>>, vector<32x64xbf16>
    %cst_37 = arith.constant dense<0.000000e+00> : vector<16x64xf32>
    %124 = tpu.matmul %122, %123, %cst_37 {dimension_numbers = #tpu.dot_dimension_numbers<[1], [0], [0], [1], [0, 0, 1, 1], [], []>} : vector<16x32xbf16>, vector<32x64xbf16>, vector<16x64xf32> -> vector<16x64xf32>
    %125 = vector.broadcast %4 : vector<1x64xf32> to vector<16x64xf32>
    %126 = arith.addf %124, %125 : vector<16x64xf32>
    %cst_38 = arith.constant 0.000000e+00 : f32
    %127 = vector.broadcast %cst_38 : f32 to vector<16x64xf32>
    %128 = arith.maximumf %126, %127 : vector<16x64xf32>
    %129 = arith.truncf %128 : vector<16x64xf32> to vector<16x64xbf16>
    %c0_39 = arith.constant 0 : index
    %c0_40 = arith.constant 0 : index
    %130 = vector.load %arg7[%c0_39, %c0_40] : memref<64x32xbf16, #tpu.memory_space<vmem>>, vector<64x32xbf16>
    %cst_41 = arith.constant dense<0.000000e+00> : vector<16x32xf32>
    %131 = tpu.matmul %129, %130, %cst_41 {dimension_numbers = #tpu.dot_dimension_numbers<[1], [0], [0], [1], [0, 0, 1, 1], [], []>} : vector<16x64xbf16>, vector<64x32xbf16>, vector<16x32xf32> -> vector<16x32xf32>
    %132 = arith.addf %121, %131 : vector<16x32xf32>
    %133 = vector.broadcast %5 : vector<1x32xf32> to vector<16x32xf32>
    %134 = arith.addf %132, %133 : vector<16x32xf32>
    %cst_42 = arith.constant dense<0.000000e+00> : vector<16xf32>
    %135 = vector.multi_reduction <add>, %134, %cst_42 [1] : vector<16x32xf32> to vector<16xf32>
    %136 = vector.shape_cast %135 : vector<16xf32> to vector<16x1xf32>
    %cst_43 = arith.constant 3.125000e-02 : f32
    %137 = vector.broadcast %cst_43 : f32 to vector<16x1xf32>
    %138 = arith.mulf %136, %137 : vector<16x1xf32>
    %139 = arith.mulf %134, %134 : vector<16x32xf32>
    %cst_44 = arith.constant dense<0.000000e+00> : vector<16xf32>
    %140 = vector.multi_reduction <add>, %139, %cst_44 [1] : vector<16x32xf32> to vector<16xf32>
    %141 = vector.shape_cast %140 : vector<16xf32> to vector<16x1xf32>
    %cst_45 = arith.constant 3.125000e-02 : f32
    %142 = vector.broadcast %cst_45 : f32 to vector<16x1xf32>
    %143 = arith.mulf %141, %142 : vector<16x1xf32>
    %144 = arith.mulf %138, %138 : vector<16x1xf32>
    %145 = arith.subf %143, %144 : vector<16x1xf32>
    %146 = vector.broadcast %138 : vector<16x1xf32> to vector<16x32xf32>
    %147 = arith.subf %134, %146 : vector<16x32xf32>
    %cst_46 = arith.constant 9.99999974E-6 : f32
    %148 = vector.broadcast %cst_46 : f32 to vector<16x1xf32>
    %149 = arith.addf %145, %148 : vector<16x1xf32>
    %150 = math.rsqrt %149 : vector<16x1xf32>
    %151 = vector.broadcast %150 : vector<16x1xf32> to vector<16x32xf32>
    %152 = arith.mulf %147, %151 : vector<16x32xf32>
    %153 = vector.broadcast %8 : vector<1x32xf32> to vector<16x32xf32>
    %154 = arith.mulf %152, %153 : vector<16x32xf32>
    %155 = vector.broadcast %9 : vector<1x32xf32> to vector<16x32xf32>
    %156 = arith.addf %154, %155 : vector<16x32xf32>
    %c0_47 = arith.constant 0 : index
    %c0_48 = arith.constant 0 : index
    %157 = vector.load %arg9[%c0_47, %c0_48] : memref<16x32xf32, #tpu.memory_space<vmem>>, vector<16x32xf32>
    tpu.vector_store %arg9[%c0_47, %c0_48], %156 {strides = array<i32>} : memref<16x32xf32, #tpu.memory_space<vmem>>, vector<16x32xf32>,
    return
  }
  func.func @transform_0(%arg0: i32) -> (i32, i32) {
    %c0_i32 = arith.constant 0 : i32
    %c0_i32_0 = arith.constant 0 : i32
    return %arg0, %c0_i32 : i32, i32
  }
  func.func @transform_1(%arg0: i32) -> (i32, i32) {
    %c0_i32 = arith.constant 0 : i32
    %c0_i32_0 = arith.constant 0 : i32
    return %arg0, %c0_i32 : i32, i32
  }
  func.func @transform_2(%arg0: i32) -> (i32, i32) {
    %c0_i32 = arith.constant 0 : i32
    %c0_i32_0 = arith.constant 0 : i32
    %c0_i32_1 = arith.constant 0 : i32
    return %c0_i32, %c0_i32_0 : i32, i32
  }
  func.func @transform_3(%arg0: i32) -> (i32, i32) {
    %c0_i32 = arith.constant 0 : i32
    %c0_i32_0 = arith.constant 0 : i32
    %c0_i32_1 = arith.constant 0 : i32
    return %c0_i32, %c0_i32_0 : i32, i32
  }
  func.func @transform_4(%arg0: i32) -> (i32, i32) {
    %c0_i32 = arith.constant 0 : i32
    %c0_i32_0 = arith.constant 0 : i32
    %c0_i32_1 = arith.constant 0 : i32
    return %c0_i32, %c0_i32_0 : i32, i32
  }
  func.func @transform_5(%arg0: i32) -> (i32, i32) {
    %c0_i32 = arith.constant 0 : i32
    %c0_i32_0 = arith.constant 0 : i32
    %c0_i32_1 = arith.constant 0 : i32
    return %c0_i32, %c0_i32_0 : i32, i32
  }
  func.func @transform_6(%arg0: i32) -> (i32, i32) {
    %c0_i32 = arith.constant 0 : i32
    %c0_i32_0 = arith.constant 0 : i32
    %c0_i32_1 = arith.constant 0 : i32
    return %c0_i32, %c0_i32_0 : i32, i32
  }
  func.func @transform_7(%arg0: i32) -> (i32, i32) {
    %c0_i32 = arith.constant 0 : i32
    %c0_i32_0 = arith.constant 0 : i32
    %c0_i32_1 = arith.constant 0 : i32
    return %c0_i32, %c0_i32_0 : i32, i32
  }
  func.func @transform_8(%arg0: i32) -> (i32, i32) {
    %c0_i32 = arith.constant 0 : i32
    %c0_i32_0 = arith.constant 0 : i32
    return %arg0, %c0_i32 : i32, i32
  }
}

</mosaic_0001>

<llo_original>
// kernel: tpu_custom_call.1
$region0: #{tpu_custom_call.1}
  #allocation0 [shape = 'u32[]', space=smem, size = 0x4, offset = 0x4, fixed_abs, tag = 'smem constant byte address 0x4 - core index']
  #allocation1 [shape = 'u32[144,128]{1,0:T(1,128)}', space=vmem, size = 0x12000, scoped, tag = 'internal scratch']
  %s0 = inlined_call_operand.vmem [shape: f32[32,32], index: 0, kind: input, shape index: {}]
  %s1 = inlined_call_operand.vmem [shape: f32[16,32], index: 1, kind: input, shape index: {}]
  %s2 = inlined_call_operand.hbm [shape: bf16[32,32], index: 2, kind: input, shape index: {}]
  %s3 = inlined_call_operand.hbm [shape: bf16[32,64], index: 3, kind: input, shape index: {}]
  %s4 = inlined_call_operand.hbm [shape: bf16[32,32], index: 4, kind: input, shape index: {}]
  %s5 = inlined_call_operand.hbm [shape: bf16[32,64], index: 5, kind: input, shape index: {}]
  %s6 = inlined_call_operand.vmem [shape: bf16[64,32], index: 6, kind: input, shape index: {}]
  %s7 = inlined_call_operand.hbm [shape: f32[9,64], index: 7, kind: input, shape index: {}]
  %s8 = inlined_call_operand.hbm [shape: f32[32,32], index: 8, kind: output, shape index: {}]
  %s9 = sld [smem:[#allocation0]]
  $region85: #{tpu_custom_call.1} parent=0
    _
  %s11 = ssub.s32 1, %s9
  %s12 = scalar_select 0, %s11, %s9
  $region1: #{tpu_custom_call.1} parent=0
    #allocation2 [shape = 'u8[8192]{0}', space=vmem, size = 0x2000, scoped, tag = 'input window, operand 2, single buffered']
    #allocation3 [shape = 's32[2]{0}', space=sflag, size = 0x8, scoped, tag = 'scoped memory for tpu_custom_call.1']
    #allocation4 [shape = 's32[2]{0}', space=sflag, size = 0x8, scoped, tag = 'scoped memory for tpu_custom_call.1']
    #allocation5 [shape = 'u8[8192]{0}', space=vmem, size = 0x2000, scoped, tag = 'input window, operand 3, single buffered']
    #allocation6 [shape = 's32[1]{0}', space=sflag, size = 0x4, scoped, tag = 'scoped memory for tpu_custom_call.1']
    #allocation7 [shape = 'u8[8192]{0}', space=vmem, size = 0x2000, scoped, tag = 'input window, operand 4, single buffered']
    #allocation8 [shape = 'u8[8192]{0}', space=vmem, size = 0x2000, scoped, tag = 'input window, operand 5, single buffered']
    #allocation9 [shape = 's32[1]{0}', space=sflag, size = 0x4, scoped, tag = 'scoped memory for tpu_custom_call.1']
    #allocation10 [shape = 'u8[8192]{0}', space=vmem, size = 0x2000, scoped, tag = 'input window, operand 7, single buffered']
    #allocation11 [shape = 'u8[16384]{0}', space=vmem, size = 0x4000, scoped, tag = 'output window, operand 0']
    %13 = vsyncpa [#allocation3], 0
    %14 = vsyncpa [#allocation6], 0
    %15 = vsyncpa [#allocation9], 0
    %16 = vsyncpa [#allocation4], 0
    %s17 = scalar_lea.sflag [#allocation4], 1
    %18 = vsyncpa %s17, 0
    loop: start=0, step=1, limit=4
    $region2: #{tpu_custom_call.1} parent=1 // loop_pre_header
      _
    $region3: #{tpu_custom_call.1} parent=1 // loop_header
      %s20 = sphi 0, %s24
      %p21 = scmp.ge.s32.totalorder %s20, 4
      %s30 = sphi 0, %s32
      %s33 = sphi 0, %s30
      %s34 = sphi 0, %s33
      %s50 = sphi 0, %s34
      %s56 = sphi 0, %s58
      %s59 = sphi 0, %s56
      %s60 = sphi 0, %s59
      %s76 = sphi 0, %s60
      %s80 = sphi 0, %s80
      %s82 = sphi 0, %s80
      %s83 = sphi 0, %s82
      %s97 = sphi 0, %s83
      %s101 = sphi 0, %s101
      %s103 = sphi 0, %s101
      %s104 = sphi 0, %s103
      %s118 = sphi 0, %s104
      %s122 = sphi 0, %s122
      %s124 = sphi 0, %s122
      %s125 = sphi 0, %s124
      %s139 = sphi 0, %s125
      %s143 = sphi 0, %s143
      %s145 = sphi 0, %s143
      %s146 = sphi 0, %s145
      %s160 = sphi 0, %s146
      %s164 = sphi 0, %s164
      %s166 = sphi 0, %s164
      %s167 = sphi 0, %s166
      %s181 = sphi 0, %s167
      %s185 = sphi 0, %s185
      %s187 = sphi 0, %s185
      %s188 = sphi 0, %s187
      %s202 = sphi 0, %s188
      %s208 = sphi 0, %s210
      %s211 = sphi 0, %s208
      %s212 = sphi 0, %s211
      %s228 = sphi 0, %s212
    $region4: #{tpu_custom_call.1} parent=1 // loop_header_branch
      %23 = sbr.rel (%p21) target = $region8
    $region5: #{tpu_custom_call.1} parent=1 // loop_body
      %s25 = ssub.s32 %s20, 1
      %s26 = ssub.s32 %s20, 2
      %s27 = sadd.s32 %s20, 1
      %s28 = ssub.s32 %s20, %s27
      %p29 = scmp.eq.s32.totalorder %s28, 0
      %s31 = sadd.s32 %s30, 1
      %s32 = scalar_select %p29, %s30, %s31
      %p35 = pneg %p29
      %p36 = scmp.eq.s32.totalorder %s20, 1
      %p37 = por %p35, %p36
      %p38 = scmp.ne.s32.totalorder %s30, %s33
      %p39 = scmp.eq.s32.totalorder %s20, 0
      %p40 = por %p38, %p39
      %p41 = scmp.ne.s32.totalorder %s30, %s33
      %p42 = scmp.eq.s32.totalorder %s25, 1
      %p43 = por %p41, %p42
      %p44 = scmp.ne.s32.totalorder %s33, %s34
      %p45 = scmp.eq.s32.totalorder %s25, 0
      %p46 = por %p44, %p45
      %p47 = scmp.ne.s32.totalorder %s33, %s34
      %p48 = scmp.eq.s32.totalorder %s26, 1
      %p49 = por %p47, %p48
      %p51 = scmp.ne.s32.totalorder %s34, %s50
      %p52 = scmp.eq.s32.totalorder %s26, 0
      %p53 = por %p51, %p52
      %s54 = ssub.s32 %s20, %s27
      %p55 = scmp.eq.s32.totalorder %s54, 0
      %s57 = sadd.s32 %s56, 1
      %s58 = scalar_select %p55, %s56, %s57
      %p61 = pneg %p55
      %p62 = scmp.eq.s32.totalorder %s20, 1
      %p63 = por %p61, %p62
      %p64 = scmp.ne.s32.totalorder %s56, %s59
      %p65 = scmp.eq.s32.totalorder %s20, 0
      %p66 = por %p64, %p65
      %p67 = scmp.ne.s32.totalorder %s56, %s59
      %p68 = scmp.eq.s32.totalorder %s25, 1
      %p69 = por %p67, %p68
      %p70 = scmp.ne.s32.totalorder %s59, %s60
      %p71 = scmp.eq.s32.totalorder %s25, 0
      %p72 = por %p70, %p71
      %p73 = scmp.ne.s32.totalorder %s59, %s60
      %p74 = scmp.eq.s32.totalorder %s26, 1
      %p75 = por %p73, %p74
      %p77 = scmp.ne.s32.totalorder %s60, %s76
      %p78 = scmp.eq.s32.totalorder %s26, 0
      %p79 = por %p77, %p78
      %s81 = sadd.s32 %s80, 1
      %p84 = scmp.eq.s32.totalorder %s20, 1
      %p85 = scmp.ne.s32.totalorder %s80, %s82
      %p86 = scmp.eq.s32.totalorder %s20, 0
      %p87 = por %p85, %p86
      %p88 = scmp.ne.s32.totalorder %s80, %s82
      %p89 = scmp.eq.s32.totalorder %s25, 1
      %p90 = por %p88, %p89
      %p91 = scmp.ne.s32.totalorder %s82, %s83
      %p92 = scmp.eq.s32.totalorder %s25, 0
      %p93 = por %p91, %p92
      %p94 = scmp.ne.s32.totalorder %s82, %s83
      %p95 = scmp.eq.s32.totalorder %s26, 1
      %p96 = por %p94, %p95
      %p98 = scmp.ne.s32.totalorder %s83, %s97
      %p99 = scmp.eq.s32.totalorder %s26, 0
      %p100 = por %p98, %p99
      %s102 = sadd.s32 %s101, 1
      %p105 = scmp.eq.s32.totalorder %s20, 1
      %p106 = scmp.ne.s32.totalorder %s101, %s103
      %p107 = scmp.eq.s32.totalorder %s20, 0
      %p108 = por %p106, %p107
      %p109 = scmp.ne.s32.totalorder %s101, %s103
      %p110 = scmp.eq.s32.totalorder %s25, 1
      %p111 = por %p109, %p110
      %p112 = scmp.ne.s32.totalorder %s103, %s104
      %p113 = scmp.eq.s32.totalorder %s25, 0
      %p114 = por %p112, %p113
      %p115 = scmp.ne.s32.totalorder %s103, %s104
      %p116 = scmp.eq.s32.totalorder %s26, 1
      %p117 = por %p115, %p116
      %p119 = scmp.ne.s32.totalorder %s104, %s118
      %p120 = scmp.eq.s32.totalorder %s26, 0
      %p121 = por %p119, %p120
      %s123 = sadd.s32 %s122, 1
      %p126 = scmp.eq.s32.totalorder %s20, 1
      %p127 = scmp.ne.s32.totalorder %s122, %s124
      %p128 = scmp.eq.s32.totalorder %s20, 0
      %p129 = por %p127, %p128
      %p130 = scmp.ne.s32.totalorder %s122, %s124
      %p131 = scmp.eq.s32.totalorder %s25, 1
      %p132 = por %p130, %p131
      %p133 = scmp.ne.s32.totalorder %s124, %s125
      %p134 = scmp.eq.s32.totalorder %s25, 0
      %p135 = por %p133, %p134
      %p136 = scmp.ne.s32.totalorder %s124, %s125
      %p137 = scmp.eq.s32.totalorder %s26, 1
      %p138 = por %p136, %p137
      %p140 = scmp.ne.s32.totalorder %s125, %s139
      %p141 = scmp.eq.s32.totalorder %s26, 0
      %p142 = por %p140, %p141
      %s144 = sadd.s32 %s143, 1
      %p147 = scmp.eq.s32.totalorder %s20, 1
      %p148 = scmp.ne.s32.totalorder %s143, %s145
      %p149 = scmp.eq.s32.totalorder %s20, 0
      %p150 = por %p148, %p149
      %p151 = scmp.ne.s32.totalorder %s143, %s145
      %p152 = scmp.eq.s32.totalorder %s25, 1
      %p153 = por %p151, %p152
      %p154 = scmp.ne.s32.totalorder %s145, %s146
      %p155 = scmp.eq.s32.totalorder %s25, 0
      %p156 = por %p154, %p155
      %p157 = scmp.ne.s32.totalorder %s145, %s146
      %p158 = scmp.eq.s32.totalorder %s26, 1
      %p159 = por %p157, %p158
      %p161 = scmp.ne.s32.totalorder %s146, %s160
      %p162 = scmp.eq.s32.totalorder %s26, 0
      %p163 = por %p161, %p162
      %s165 = sadd.s32 %s164, 1
      %p168 = scmp.eq.s32.totalorder %s20, 1
      %p169 = scmp.ne.s32.totalorder %s164, %s166
      %p170 = scmp.eq.s32.totalorder %s20, 0
      %p171 = por %p169, %p170
      %p172 = scmp.ne.s32.totalorder %s164, %s166
      %p173 = scmp.eq.s32.totalorder %s25, 1
      %p174 = por %p172, %p173
      %p175 = scmp.ne.s32.totalorder %s166, %s167
      %p176 = scmp.eq.s32.totalorder %s25, 0
      %p177 = por %p175, %p176
      %p178 = scmp.ne.s32.totalorder %s166, %s167
      %p179 = scmp.eq.s32.totalorder %s26, 1
      %p180 = por %p178, %p179
      %p182 = scmp.ne.s32.totalorder %s167, %s181
      %p183 = scmp.eq.s32.totalorder %s26, 0
      %p184 = por %p182, %p183
      %s186 = sadd.s32 %s185, 1
      %p189 = scmp.eq.s32.totalorder %s20, 1
      %p190 = scmp.ne.s32.totalorder %s185, %s187
      %p191 = scmp.eq.s32.totalorder %s20, 0
      %p192 = por %p190, %p191
      %p193 = scmp.ne.s32.totalorder %s185, %s187
      %p194 = scmp.eq.s32.totalorder %s25, 1
      %p195 = por %p193, %p194
      %p196 = scmp.ne.s32.totalorder %s187, %s188
      %p197 = scmp.eq.s32.totalorder %s25, 0
      %p198 = por %p196, %p197
      %p199 = scmp.ne.s32.totalorder %s187, %s188
      %p200 = scmp.eq.s32.totalorder %s26, 1
      %p201 = por %p199, %p200
      %p203 = scmp.ne.s32.totalorder %s188, %s202
      %p204 = scmp.eq.s32.totalorder %s26, 0
      %p205 = por %p203, %p204
      %s206 = ssub.s32 %s20, %s27
      %p207 = scmp.eq.s32.totalorder %s206, 0
      %s209 = sadd.s32 %s208, 1
      %s210 = scalar_select %p207, %s208, %s209
      %p213 = pneg %p207
      %p214 = scmp.eq.s32.totalorder %s20, 1
      %p215 = por %p213, %p214
      %p216 = scmp.ne.s32.totalorder %s208, %s211
      %p217 = scmp.eq.s32.totalorder %s20, 0
      %p218 = por %p216, %p217
      %p219 = scmp.ne.s32.totalorder %s208, %s211
      %p220 = scmp.eq.s32.totalorder %s25, 1
      %p221 = por %p219, %p220
      %p222 = scmp.ne.s32.totalorder %s211, %s212
      %p223 = scmp.eq.s32.totalorder %s25, 0
      %p224 = por %p222, %p223
      %p225 = scmp.ne.s32.totalorder %s211, %s212
      %p226 = scmp.eq.s32.totalorder %s26, 1
      %p227 = por %p225, %p226
      %p229 = scmp.ne.s32.totalorder %s212, %s228
      %p230 = scmp.eq.s32.totalorder %s26, 0
      %p231 = por %p229, %p230
      %p232 = scmp.le.s32.totalorder 1, %s20
      %p233 = scmp.lt.s32.totalorder %s20, 3
      %p234 = pnand %p232, %p233
      %p235 = pneg %p234
      // Predicated region
      $region9: #{tpu_custom_call.1} parent=5 // pred_check
        _
      $region10: #{tpu_custom_call.1} parent=5 // pred_check_branch
        %237 = sbr.rel (%p234) target = $region12
      $region11: #{tpu_custom_call.1} parent=5 // pred_region
        %s238 = ssub.s32 %s20, 1
        // Predicated region
        $region13: #{tpu_custom_call.1} parent=11 // pred_check
          %p239 = pneg %p93
        $region14: #{tpu_custom_call.1} parent=11 // pred_check_branch
          %241 = sbr.rel (%p239) target = $region16
        $region15: #{tpu_custom_call.1} parent=11 // pred_region
          %s243 = ssub.s32 256, 256
          %244 = vsyncadd [#allocation3], %s243
          %s245 = sshll.u32 [#allocation2], 4
          %s246 = int_to_ptr.vmem [resolvable:$true] %s245
          %251 = dma.hbm_to_vmem [thread:$0]  %s2, 256, %s246, [#allocation3], 64, 64, 4
        $region16: #{tpu_custom_call.1} parent=11 // pred_fallthru
          _
        // Predicated region
        $region17: #{tpu_custom_call.1} parent=11 // pred_check
          %p252 = pneg %p114
        $region18: #{tpu_custom_call.1} parent=11 // pred_check_branch
          %254 = sbr.rel (%p252) target = $region20
        $region19: #{tpu_custom_call.1} parent=11 // pred_region
          %s256 = ssub.s32 256, 256
          %257 = vsyncadd [#allocation6], %s256
          %s258 = sshll.u32 [#allocation5], 4
          %s259 = int_to_ptr.vmem [resolvable:$true] %s258
          %264 = dma.hbm_to_vmem [thread:$0]  %s3, 256, %s259, [#allocation6], 64, 64, 4
        $region20: #{tpu_custom_call.1} parent=11 // pred_fallthru
          _
        // Predicated region
        $region21: #{tpu_custom_call.1} parent=11 // pred_check
          %p265 = pneg %p135
        $region22: #{tpu_custom_call.1} parent=11 // pred_check_branch
          %267 = sbr.rel (%p265) target = $region24
        $region23: #{tpu_custom_call.1} parent=11 // pred_region
          %s269 = ssub.s32 256, 256
          %270 = vsyncadd [#allocation6], %s269
          %s271 = sshll.u32 [#allocation7], 4
          %s272 = int_to_ptr.vmem [resolvable:$true] %s271
          %277 = dma.hbm_to_vmem [thread:$0]  %s4, 256, %s272, [#allocation6], 64, 64, 4
        $region24: #{tpu_custom_call.1} parent=11 // pred_fallthru
          _
        // Predicated region
        $region25: #{tpu_custom_call.1} parent=11 // pred_check
          %p278 = pneg %p156
        $region26: #{tpu_custom_call.1} parent=11 // pred_check_branch
          %280 = sbr.rel (%p278) target = $region28
        $region27: #{tpu_custom_call.1} parent=11 // pred_region
          %s282 = ssub.s32 256, 256
          %283 = vsyncadd [#allocation9], %s282
          %s284 = sshll.u32 [#allocation8], 4
          %s285 = int_to_ptr.vmem [resolvable:$true] %s284
          %290 = dma.hbm_to_vmem [thread:$0]  %s5, 256, %s285, [#allocation9], 64, 64, 4
        $region28: #{tpu_custom_call.1} parent=11 // pred_fallthru
          _
        // Predicated region
        $region29: #{tpu_custom_call.1} parent=11 // pred_check
          %p291 = pneg %p177
        $region30: #{tpu_custom_call.1} parent=11 // pred_check_branch
          %293 = sbr.rel (%p291) target = $region32
        $region31: #{tpu_custom_call.1} parent=11 // pred_region
          _
        $region32: #{tpu_custom_call.1} parent=11 // pred_fallthru
          _
        // Predicated region
        $region33: #{tpu_custom_call.1} parent=11 // pred_check
          %p294 = pneg %p198
        $region34: #{tpu_custom_call.1} parent=11 // pred_check_branch
          %296 = sbr.rel (%p294) target = $region36
        $region35: #{tpu_custom_call.1} parent=11 // pred_region
          %s298 = ssub.s32 256, 256
          %299 = vsyncadd [#allocation9], %s298
          %s300 = sshll.u32 [#allocation10], 4
          %s301 = int_to_ptr.vmem [resolvable:$true] %s300
          %306 = dma.hbm_to_vmem [thread:$0]  %s7, 256, %s301, [#allocation9], 128, 128, 8
        $region36: #{tpu_custom_call.1} parent=11 // pred_fallthru
          _
      $region12: #{tpu_custom_call.1} parent=5 // pred_fallthru
        _
      %p307 = scmp.lt.s32.totalorder %s20, 2
      // Predicated region
      $region37: #{tpu_custom_call.1} parent=5 // pred_check
        %p308 = pneg %p307
      $region38: #{tpu_custom_call.1} parent=5 // pred_check_branch
        %310 = sbr.rel (%p308) target = $region40
      $region39: #{tpu_custom_call.1} parent=5 // pred_region
        // Predicated region
        $region41: #{tpu_custom_call.1} parent=39 // pred_check
          %p311 = pneg %p40
        $region42: #{tpu_custom_call.1} parent=39 // pred_check_branch
          %313 = sbr.rel (%p311) target = $region44
        $region43: #{tpu_custom_call.1} parent=39 // pred_region
          %s314 = smul.u32 2, %s20
          %p315 = scmp.lt.s32.totalorder %s314, 3
          %s316 = scalar_select %p315, %s314, 3
          %s317 = smul.addr %s316, 8
          %s318 = scalar_lea.vmem %s0, %s317
          %s319 = smul.u32 2, %s20
        $region44: #{tpu_custom_call.1} parent=39 // pred_fallthru
          _
        // Predicated region
        $region45: #{tpu_custom_call.1} parent=39 // pred_check
          %p320 = pneg %p66
        $region46: #{tpu_custom_call.1} parent=39 // pred_check_branch
          %322 = sbr.rel (%p320) target = $region48
        $region47: #{tpu_custom_call.1} parent=39 // pred_region
          %p323 = scmp.lt.s32.totalorder %s20, 1
          %s324 = scalar_select %p323, %s20, 1
          %s325 = smul.addr %s324, 8
          %s326 = scalar_lea.vmem %s1, %s325
        $region48: #{tpu_custom_call.1} parent=39 // pred_fallthru
          _
      $region40: #{tpu_custom_call.1} parent=5 // pred_fallthru
        _
      %p327 = scmp.le.s32.totalorder 1, %s20
      %p328 = scmp.lt.s32.totalorder %s20, 3
      %p329 = pnand %p327, %p328
      %p330 = pneg %p329
      // Predicated region
      $region49: #{tpu_custom_call.1} parent=5 // pred_check
        _
      $region50: #{tpu_custom_call.1} parent=5 // pred_check_branch
        %332 = sbr.rel (%p329) target = $region52
      $region51: #{tpu_custom_call.1} parent=5 // pred_region
        %s333 = ssub.s32 %s20, 1
        // Predicated region
        $region53: #{tpu_custom_call.1} parent=51 // pred_check
          %p334 = pneg %p93
        $region54: #{tpu_custom_call.1} parent=51 // pred_check_branch
          %336 = sbr.rel (%p334) target = $region56
        $region55: #{tpu_custom_call.1} parent=51 // pred_region
          %337 = dma.done [#allocation3], 256
        $region56: #{tpu_custom_call.1} parent=51 // pred_fallthru
          _
        // Predicated region
        $region57: #{tpu_custom_call.1} parent=51 // pred_check
          %p338 = pneg %p114
        $region58: #{tpu_custom_call.1} parent=51 // pred_check_branch
          %340 = sbr.rel (%p338) target = $region60
        $region59: #{tpu_custom_call.1} parent=51 // pred_region
          %341 = dma.done [#allocation6], 256
        $region60: #{tpu_custom_call.1} parent=51 // pred_fallthru
          _
        // Predicated region
        $region61: #{tpu_custom_call.1} parent=51 // pred_check
          %p342 = pneg %p135
        $region62: #{tpu_custom_call.1} parent=51 // pred_check_branch
          %344 = sbr.rel (%p342) target = $region64
        $region63: #{tpu_custom_call.1} parent=51 // pred_region
          %345 = dma.done [#allocation6], 256
        $region64: #{tpu_custom_call.1} parent=51 // pred_fallthru
          _
        // Predicated region
        $region65: #{tpu_custom_call.1} parent=51 // pred_check
          %p346 = pneg %p156
        $region66: #{tpu_custom_call.1} parent=51 // pred_check_branch
          %348 = sbr.rel (%p346) target = $region68
        $region67: #{tpu_custom_call.1} parent=51 // pred_region
          %349 = dma.done [#allocation9], 256
        $region68: #{tpu_custom_call.1} parent=51 // pred_fallthru
          _
        // Predicated region
        $region69: #{tpu_custom_call.1} parent=51 // pred_check
          %p350 = pneg %p198
        $region70: #{tpu_custom_call.1} parent=51 // pred_check_branch
          %352 = sbr.rel (%p350) target = $region72
        $region71: #{tpu_custom_call.1} parent=51 // pred_region
          %353 = dma.done [#allocation9], 256
        $region72: #{tpu_custom_call.1} parent=51 // pred_fallthru
          _
        %s354 = smul.u32 2, %s25
        %p355 = scmp.lt.s32.totalorder %s354, 3
        %s356 = scalar_select %p355, %s354, 3
        %s357 = smul.addr %s356, 8
        %s358 = scalar_lea.vmem %s0, %s357
        %p359 = pneg %p46
        %p360 = pneg %p43
        %p361 = scmp.lt.s32.totalorder %s25, 1
        %s362 = scalar_select %p361, %s25, 1
        %s363 = smul.addr %s362, 8
        %s364 = scalar_lea.vmem %s1, %s363
        %p365 = pneg %p72
        %p366 = pneg %p69
        %p367 = pneg %p93
        %p368 = pneg %p90
        %p369 = pneg %p114
        %p370 = pneg %p111
        %p371 = pneg %p135
        %p372 = pneg %p132
        %p373 = pneg %p156
        %p374 = pneg %p153
        %p375 = pneg %p177
        %p376 = pneg %p174
        %p377 = pneg %p198
        %p378 = pneg %p195
        %p379 = pneg %p224
        %p380 = pneg %p221
        %s381 = sand.u32 %s211, 1
        %s382 = scalar_lea.sflag [#allocation4], %s381
        %s383 = sand.u32 %s211, 1
        %s384 = smul.addr %s383, 16
        %s385 = scalar_lea.vmem [#allocation11], %s384
        %s386 = smul.u32 2, %s25
        %p387 = scmp.lt.s32.totalorder %s386, 3
        %s388 = scalar_select %p387, %s386, 3
        %s389 = smul.addr %s388, 8
        %s390 = scalar_lea.vmem %s0, %s389
        %s391 = smul.u32 2, %s25
        %p392 = scmp.lt.s32.totalorder %s25, 1
        %s393 = scalar_select %p392, %s25, 1
        %s394 = smul.addr %s393, 8
        %s395 = scalar_lea.vmem %s1, %s394
        %s396 = smul.u32 2, %s25
        %v398 = vld [vmem:[#allocation10] sm:$0xff]
        %v399 = vld [vmem:[#allocation10 + $0x8] sm:$0x1]
        %v400 = vld [vmem:[%s390] sm:$0xff]
        %v401 = vld [vmem:[%s390 + $0x8] sm:$0xff]
        %v402 = vld [vmem:[%s395] sm:$0xff]
        %v403 = vpack.c.bf16 %v401, %v400
        %v404 = vpack.c.bf16 %v402, %v402
        %v405 = vld [vmem:[#allocation2] sm:$0xf]
        %v406 = vld [vmem:[#allocation2 + $0x4] sm:$0xf]
        %v407 = vld [vmem:[#allocation2 + $0x8] sm:$0xf]
        %v408 = vld [vmem:[#allocation2 + $0xc] sm:$0xf]
        %v409 = vlaneseq
        %v410 = vshrl.u32 %v409, 7
        %v411 = vsub.s32 0, %v410
        %v412 = vrot.slane %v398, %v411
        %v417 = vunpack.c.l.b16 %v405
        %v418 = vunpack.c.l.b16 %v406
        %v419 = vunpack.c.l.b16 %v407
        %v420 = vunpack.c.l.b16 %v408
        %v421 = vpack.c.b16 %v418, %v417
        %v422 = vpack.c.b16 %v420, %v419
        %vm425 = vcmask 261120
        %v427 = vsel %vm425, %v403, 0
        %429 = vmatprep.subr.bf16.mxu0 0
        %430 = vmatpush1.bf16.msra.mxu0 %v421
        %431 = vmatprep.subr.bf16.mxu0 0
        %432 = vmatpush1.bf16.msra.mxu0 %v422
        %433 = vmatprep.subr.bf16.mxu0 0
        %434 = vmatpush1.bf16.msra.mxu0 0
        %435 = vmatprep.subr.bf16.mxu0 0
        %436 = vmatpush1.bf16.msra.mxu0 0
        %437 = vmatprep.subr.bf16.mxu0 0
        %438 = vmatpush1.bf16.msra.mxu0 0
        %439 = vmatprep.subr.bf16.mxu0 0
        %440 = vmatpush1.bf16.msra.mxu0 0
        %441 = vmatprep.subr.bf16.mxu0 0
        %442 = vmatpush1.bf16.msra.mxu0 0
        %443 = vmatprep.subr.bf16.mxu0 0
        %444 = vmatpush1.bf16.msra.mxu0 0
        %445 = vmatprep.subr.bf16.mxu0 0
        %446 = vmatpush1.bf16.msra.mxu0 0
        %447 = vmatprep.subr.bf16.mxu0 0
        %448 = vmatpush1.bf16.msra.mxu0 0
        %449 = vmatprep.subr.bf16.mxu0 0
        %450 = vmatpush1.bf16.msra.mxu0 0
        %451 = vmatprep.subr.bf16.mxu0 0
        %452 = vmatpush1.bf16.msra.mxu0 0
        %453 = vmatprep.subr.bf16.mxu0 0
        %454 = vmatpush1.bf16.msra.mxu0 0
        %455 = vmatprep.subr.bf16.mxu0 0
        %456 = vmatpush1.bf16.msra.mxu0 0
        %457 = vmatprep.subr.bf16.mxu0 0
        %458 = vmatpush1.bf16.msra.mxu0 0
        %459 = vmatprep.subr.bf16.mxu0 0
        %460 = vmatpush1.bf16.msra.mxu0 0
        %461 = vmatprep.mubr.bf16.mxu0 0
        %462 = vmatmul.mubr.bf16.gmra.mrb[0].mxu0 %v427
        %v463 = vpop.f32.mrb[0].mxu0
        %v464 = vadd.f32 %v412, %v463
        %v465 = vpop.f32.mrb[0].mxu0
        %v466 = vpop.f32.mrb[0].mxu0
        %v467 = vadd.f32 %v412, %v466
        %v468 = vpop.f32.mrb[0].mxu0
        %469 = vdwg.mxu0
        %v470 = vmul.f32 %v464, 0.35355338
        %v471 = vmul.f32 %v467, 0.35355338
        %v472 = vld [vmem:[#allocation5] sm:$0xf]
        %v473 = vld [vmem:[#allocation5 + $0x4] sm:$0xf]
        %v474 = vld [vmem:[#allocation5 + $0x8] sm:$0xf]
        %v475 = vld [vmem:[#allocation5 + $0xc] sm:$0xf]
        %v476 = vlaneseq
        %v477 = vshrl.u32 %v476, 7
        %v478 = vsub.s32 1, %v477
        %v479 = vrot.slane %v398, %v478
        %v484 = vunpack.c.l.b16 %v472
        %v485 = vunpack.c.l.b16 %v473
        %v486 = vunpack.c.l.b16 %v474
        %v487 = vunpack.c.l.b16 %v475
        %v488 = vpack.c.b16 %v485, %v484
        %v489 = vpack.c.b16 %v487, %v486
        %v493 = vsel %vm425, %v404, 0
        %495 = vmatprep.subr.bf16.mxu0 0
        %496 = vmatpush1.bf16.msra.mxu0 %v488
        %497 = vmatprep.subr.bf16.mxu0 0
        %498 = vmatpush1.bf16.msra.mxu0 %v489
        %499 = vmatprep.subr.bf16.mxu0 0
        %500 = vmatpush1.bf16.msra.mxu0 0
        %501 = vmatprep.subr.bf16.mxu0 0
        %502 = vmatpush1.bf16.msra.mxu0 0
        %503 = vmatprep.subr.bf16.mxu0 0
        %504 = vmatpush1.bf16.msra.mxu0 0
        %505 = vmatprep.subr.bf16.mxu0 0
        %506 = vmatpush1.bf16.msra.mxu0 0
        %507 = vmatprep.subr.bf16.mxu0 0
        %508 = vmatpush1.bf16.msra.mxu0 0
        %509 = vmatprep.subr.bf16.mxu0 0
        %510 = vmatpush1.bf16.msra.mxu0 0
        %511 = vmatprep.subr.bf16.mxu0 0
        %512 = vmatpush1.bf16.msra.mxu0 0
        %513 = vmatprep.subr.bf16.mxu0 0
        %514 = vmatpush1.bf16.msra.mxu0 0
        %515 = vmatprep.subr.bf16.mxu0 0
        %516 = vmatpush1.bf16.msra.mxu0 0
        %517 = vmatprep.subr.bf16.mxu0 0
        %518 = vmatpush1.bf16.msra.mxu0 0
        %519 = vmatprep.subr.bf16.mxu0 0
        %520 = vmatpush1.bf16.msra.mxu0 0
        %521 = vmatprep.subr.bf16.mxu0 0
        %522 = vmatpush1.bf16.msra.mxu0 0
        %523 = vmatprep.subr.bf16.mxu0 0
        %524 = vmatpush1.bf16.msra.mxu0 0
        %525 = vmatprep.subr.bf16.mxu0 0
        %526 = vmatpush1.bf16.msra.mxu0 0
        %527 = vmatprep.mubr.bf16.mxu0 0
        %528 = vmatmul.mubr.bf16.gmra.mrb[0].mxu0 %v493
        %v529 = vpop.f32.mrb[0].mxu0
        %v530 = vadd.f32 %v479, %v529
        %v531 = vpop.f32.mrb[0].mxu0
        %v532 = vpop.f32.mrb[0].mxu0
        %v533 = vpop.f32.mrb[0].mxu0
        %534 = vdwg.mxu0
        %v535 = vpack.c.bf16 %v471, %v470
        %v536 = vpack.c.bf16 %v530, %v530
        %vm537 = vcmask 64512
        %v539 = vsel %vm537, %v535, 0
        %v542 = vsel %vm537, %v536, 0
        %544 = vmatprep.subr.bf16.mxu0 0
        %545 = vmatpush1.bf16.xpose.msra.mxu0 %v542
        %546 = vmatprep.subr.bf16.mxu0 0
        %547 = vmatpush1.bf16.xpose.msra.mxu0 0
        %548 = vmatprep.subr.bf16.mxu0 0
        %549 = vmatpush1.bf16.xpose.msra.mxu0 0
        %550 = vmatprep.subr.bf16.mxu0 0
        %551 = vmatpush1.bf16.xpose.msra.mxu0 0
        %552 = vmatprep.subr.bf16.mxu0 0
        %553 = vmatpush1.bf16.xpose.msra.mxu0 0
        %554 = vmatprep.subr.bf16.mxu0 0
        %555 = vmatpush1.bf16.xpose.msra.mxu0 0
        %556 = vmatprep.subr.bf16.mxu0 0
        %557 = vmatpush1.bf16.xpose.msra.mxu0 0
        %558 = vmatprep.subr.bf16.mxu0 0
        %559 = vmatpush1.bf16.xpose.msra.mxu0 0
        %560 = vmatprep.subr.bf16.mxu0 0
        %561 = vmatpush1.bf16.xpose.msra.mxu0 0
        %562 = vmatprep.subr.bf16.mxu0 0
        %563 = vmatpush1.bf16.xpose.msra.mxu0 0
        %564 = vmatprep.subr.bf16.mxu0 0
        %565 = vmatpush1.bf16.xpose.msra.mxu0 0
        %566 = vmatprep.subr.bf16.mxu0 0
        %567 = vmatpush1.bf16.xpose.msra.mxu0 0
        %568 = vmatprep.subr.bf16.mxu0 0
        %569 = vmatpush1.bf16.xpose.msra.mxu0 0
        %570 = vmatprep.subr.bf16.mxu0 0
        %571 = vmatpush1.bf16.xpose.msra.mxu0 0
        %572 = vmatprep.subr.bf16.mxu0 0
        %573 = vmatpush1.bf16.xpose.msra.mxu0 0
        %574 = vmatprep.subr.bf16.mxu0 0
        %575 = vmatpush1.bf16.xpose.msra.mxu0 0
        %576 = vmatprep.mubr.bf16.mxu0 0
        %577 = vmatmul.mubr.bf16.gmra.mrb[0].mxu0 %v539
        %v578 = vpop.f32.mrb[0].mxu0
        %v579 = vadd.f32 0.0, %v578
        %v580 = vpop.f32.mrb[0].mxu0
        %v581 = vpop.f32.mrb[0].mxu0
        %v582 = vadd.f32 0.0, %v581
        %v583 = vpop.f32.mrb[0].mxu0
        %584 = vdwg.mxu0
        %v585 = vsel %vm537, %v579, -inf
        %586 = vmax.xlane.f32.xlu0 %v585
        %v587 = vpop.xlane.xlu0 %586
        %v588 = vsel %vm537, %v582, -inf
        %589 = vmax.xlane.f32.xlu0 %v588
        %v590 = vpop.xlane.xlu0 %589
        %v591 = vsub.f32 %v579, %v587
        %v592 = vsub.f32 %v582, %v590
        %v593 = vmul.f32 %v591, 1.442695
        %v594 = vpow.pop %v593
        %v595 = vmul.f32 %v592, 1.442695
        %v596 = vpow.pop %v595
        %v597 = vsel %vm537, %v594, 0.0
        %598 = vadd.xlane.f32.xlu0 %v597
        %v599 = vpop.xlane.xlu0 %598
        %v600 = vsel %vm537, %v596, 0.0
        %601 = vadd.xlane.f32.xlu0 %v600
        %v602 = vpop.xlane.xlu0 %601
        %v603 = vrcp.pop %v599
        %v604 = vrcp.pop %v602
        %v605 = vmul.f32 %v594, %v603
        %v606 = vmul.f32 %v596, %v604
        %v607 = vpack.c.bf16 %v606, %v605
        %609 = vrot.lane.b32.xlu0 %v536, 96
        %v610 = vpop.permute.xlu0 %609
        %v612 = vsel %vm537, %v607, 0
        %vm614 = vcmask 1043456
        %v616 = vsel %vm614, %v610, 0
        %618 = vmatprep.subr.bf16.mxu0 0
        %619 = vmatpush1.bf16.msra.mxu0 %v616
        %620 = vmatprep.subr.bf16.mxu0 0
        %621 = vmatpush1.bf16.msra.mxu0 0
        %622 = vmatprep.subr.bf16.mxu0 0
        %623 = vmatpush1.bf16.msra.mxu0 0
        %624 = vmatprep.subr.bf16.mxu0 0
        %625 = vmatpush1.bf16.msra.mxu0 0
        %626 = vmatprep.subr.bf16.mxu0 0
        %627 = vmatpush1.bf16.msra.mxu0 0
        %628 = vmatprep.subr.bf16.mxu0 0
        %629 = vmatpush1.bf16.msra.mxu0 0
        %630 = vmatprep.subr.bf16.mxu0 0
        %631 = vmatpush1.bf16.msra.mxu0 0
        %632 = vmatprep.subr.bf16.mxu0 0
        %633 = vmatpush1.bf16.msra.mxu0 0
        %634 = vmatprep.subr.bf16.mxu0 0
        %635 = vmatpush1.bf16.msra.mxu0 0
        %636 = vmatprep.subr.bf16.mxu0 0
        %637 = vmatpush1.bf16.msra.mxu0 0
        %638 = vmatprep.subr.bf16.mxu0 0
        %639 = vmatpush1.bf16.msra.mxu0 0
        %640 = vmatprep.subr.bf16.mxu0 0
        %641 = vmatpush1.bf16.msra.mxu0 0
        %642 = vmatprep.subr.bf16.mxu0 0
        %643 = vmatpush1.bf16.msra.mxu0 0
        %644 = vmatprep.subr.bf16.mxu0 0
        %645 = vmatpush1.bf16.msra.mxu0 0
        %646 = vmatprep.subr.bf16.mxu0 0
        %647 = vmatpush1.bf16.msra.mxu0 0
        %648 = vmatprep.subr.bf16.mxu0 0
        %649 = vmatpush1.bf16.msra.mxu0 0
        %650 = vmatprep.mubr.bf16.mxu0 0
        %651 = vmatmul.mubr.bf16.gmra.mrb[0].mxu0 %v612
        %v652 = vpop.f32.mrb[0].mxu0
        %v653 = vadd.f32 0.0, %v652
        %v654 = vpop.f32.mrb[0].mxu0
        %v655 = vpop.f32.mrb[0].mxu0
        %v656 = vadd.f32 0.0, %v655
        %v657 = vpop.f32.mrb[0].mxu0
        %658 = vdwg.mxu0
        %660 = vrot.lane.b32.xlu0 %v535, 120
        %v661 = vpop.permute.xlu0 %660
        %662 = vrot.lane.b32.xlu0 %v536, 120
        %v663 = vpop.permute.xlu0 %662
        %v665 = vsel %vm537, %v661, 0
        %v668 = vsel %vm537, %v663, 0
        %670 = vmatprep.subr.bf16.mxu0 0
        %671 = vmatpush1.bf16.xpose.msra.mxu0 %v668
        %672 = vmatprep.subr.bf16.mxu0 0
        %673 = vmatpush1.bf16.xpose.msra.mxu0 0
        %674 = vmatprep.subr.bf16.mxu0 0
        %675 = vmatpush1.bf16.xpose.msra.mxu0 0
        %676 = vmatprep.subr.bf16.mxu0 0
        %677 = vmatpush1.bf16.xpose.msra.mxu0 0
        %678 = vmatprep.subr.bf16.mxu0 0
        %679 = vmatpush1.bf16.xpose.msra.mxu0 0
        %680 = vmatprep.subr.bf16.mxu0 0
        %681 = vmatpush1.bf16.xpose.msra.mxu0 0
        %682 = vmatprep.subr.bf16.mxu0 0
        %683 = vmatpush1.bf16.xpose.msra.mxu0 0
        %684 = vmatprep.subr.bf16.mxu0 0
        %685 = vmatpush1.bf16.xpose.msra.mxu0 0
        %686 = vmatprep.subr.bf16.mxu0 0
        %687 = vmatpush1.bf16.xpose.msra.mxu0 0
        %688 = vmatprep.subr.bf16.mxu0 0
        %689 = vmatpush1.bf16.xpose.msra.mxu0 0
        %690 = vmatprep.subr.bf16.mxu0 0
        %691 = vmatpush1.bf16.xpose.msra.mxu0 0
        %692 = vmatprep.subr.bf16.mxu0 0
        %693 = vmatpush1.bf16.xpose.msra.mxu0 0
        %694 = vmatprep.subr.bf16.mxu0 0
        %695 = vmatpush1.bf16.xpose.msra.mxu0 0
        %696 = vmatprep.subr.bf16.mxu0 0
        %697 = vmatpush1.bf16.xpose.msra.mxu0 0
        %698 = vmatprep.subr.bf16.mxu0 0
        %699 = vmatpush1.bf16.xpose.msra.mxu0 0
        %700 = vmatprep.subr.bf16.mxu0 0
        %701 = vmatpush1.bf16.xpose.msra.mxu0 0
        %702 = vmatprep.mubr.bf16.mxu0 0
        %703 = vmatmul.mubr.bf16.gmra.mrb[0].mxu0 %v665
        %v704 = vpop.f32.mrb[0].mxu0
        %v705 = vadd.f32 0.0, %v704
        %v706 = vpop.f32.mrb[0].mxu0
        %v707 = vpop.f32.mrb[0].mxu0
        %v708 = vadd.f32 0.0, %v707
        %v709 = vpop.f32.mrb[0].mxu0
        %710 = vdwg.mxu0
        %v711 = vsel %vm537, %v705, -inf
        %712 = vmax.xlane.f32.xlu0 %v711
        %v713 = vpop.xlane.xlu0 %712
        %v714 = vsel %vm537, %v708, -inf
        %715 = vmax.xlane.f32.xlu0 %v714
        %v716 = vpop.xlane.xlu0 %715
        %v717 = vsub.f32 %v705, %v713
        %v718 = vsub.f32 %v708, %v716
        %v719 = vmul.f32 %v717, 1.442695
        %v720 = vpow.pop %v719
        %v721 = vmul.f32 %v718, 1.442695
        %v722 = vpow.pop %v721
        %v723 = vsel %vm537, %v720, 0.0
        %724 = vadd.xlane.f32.xlu0 %v723
        %v725 = vpop.xlane.xlu0 %724
        %v726 = vsel %vm537, %v722, 0.0
        %727 = vadd.xlane.f32.xlu0 %v726
        %v728 = vpop.xlane.xlu0 %727
        %v729 = vrcp.pop %v725
        %v730 = vrcp.pop %v728
        %v731 = vmul.f32 %v720, %v729
        %v732 = vmul.f32 %v722, %v730
        %v733 = vpack.c.bf16 %v732, %v731
        %734 = vrot.lane.b32.xlu0 %v536, 88
        %v735 = vpop.permute.xlu0 %734
        %v737 = vsel %vm537, %v733, 0
        %v740 = vsel %vm614, %v735, 0
        %742 = vmatprep.subr.bf16.mxu0 0
        %743 = vmatpush1.bf16.msra.mxu0 %v740
        %744 = vmatprep.subr.bf16.mxu0 0
        %745 = vmatpush1.bf16.msra.mxu0 0
        %746 = vmatprep.subr.bf16.mxu0 0
        %747 = vmatpush1.bf16.msra.mxu0 0
        %748 = vmatprep.subr.bf16.mxu0 0
        %749 = vmatpush1.bf16.msra.mxu0 0
        %750 = vmatprep.subr.bf16.mxu0 0
        %751 = vmatpush1.bf16.msra.mxu0 0
        %752 = vmatprep.subr.bf16.mxu0 0
        %753 = vmatpush1.bf16.msra.mxu0 0
        %754 = vmatprep.subr.bf16.mxu0 0
        %755 = vmatpush1.bf16.msra.mxu0 0
        %756 = vmatprep.subr.bf16.mxu0 0
        %757 = vmatpush1.bf16.msra.mxu0 0
        %758 = vmatprep.subr.bf16.mxu0 0
        %759 = vmatpush1.bf16.msra.mxu0 0
        %760 = vmatprep.subr.bf16.mxu0 0
        %761 = vmatpush1.bf16.msra.mxu0 0
        %762 = vmatprep.subr.bf16.mxu0 0
        %763 = vmatpush1.bf16.msra.mxu0 0
        %764 = vmatprep.subr.bf16.mxu0 0
        %765 = vmatpush1.bf16.msra.mxu0 0
        %766 = vmatprep.subr.bf16.mxu0 0
        %767 = vmatpush1.bf16.msra.mxu0 0
        %768 = vmatprep.subr.bf16.mxu0 0
        %769 = vmatpush1.bf16.msra.mxu0 0
        %770 = vmatprep.subr.bf16.mxu0 0
        %771 = vmatpush1.bf16.msra.mxu0 0
        %772 = vmatprep.subr.bf16.mxu0 0
        %773 = vmatpush1.bf16.msra.mxu0 0
        %774 = vmatprep.mubr.bf16.mxu0 0
        %775 = vmatmul.mubr.bf16.gmra.mrb[0].mxu0 %v737
        %v776 = vpop.f32.mrb[0].mxu0
        %v777 = vadd.f32 0.0, %v776
        %v778 = vpop.f32.mrb[0].mxu0
        %v779 = vpop.f32.mrb[0].mxu0
        %v780 = vadd.f32 0.0, %v779
        %v781 = vpop.f32.mrb[0].mxu0
        %782 = vdwg.mxu0
        %783 = vrot.lane.b32.xlu0 %v535, 112
        %v784 = vpop.permute.xlu0 %783
        %785 = vrot.lane.b32.xlu0 %v536, 112
        %v786 = vpop.permute.xlu0 %785
        %v788 = vsel %vm537, %v784, 0
        %v791 = vsel %vm537, %v786, 0
        %793 = vmatprep.subr.bf16.mxu0 0
        %794 = vmatpush1.bf16.xpose.msra.mxu0 %v791
        %795 = vmatprep.subr.bf16.mxu0 0
        %796 = vmatpush1.bf16.xpose.msra.mxu0 0
        %797 = vmatprep.subr.bf16.mxu0 0
        %798 = vmatpush1.bf16.xpose.msra.mxu0 0
        %799 = vmatprep.subr.bf16.mxu0 0
        %800 = vmatpush1.bf16.xpose.msra.mxu0 0
        %801 = vmatprep.subr.bf16.mxu0 0
        %802 = vmatpush1.bf16.xpose.msra.mxu0 0
        %803 = vmatprep.subr.bf16.mxu0 0
        %804 = vmatpush1.bf16.xpose.msra.mxu0 0
        %805 = vmatprep.subr.bf16.mxu0 0
        %806 = vmatpush1.bf16.xpose.msra.mxu0 0
        %807 = vmatprep.subr.bf16.mxu0 0
        %808 = vmatpush1.bf16.xpose.msra.mxu0 0
        %809 = vmatprep.subr.bf16.mxu0 0
        %810 = vmatpush1.bf16.xpose.msra.mxu0 0
        %811 = vmatprep.subr.bf16.mxu0 0
        %812 = vmatpush1.bf16.xpose.msra.mxu0 0
        %813 = vmatprep.subr.bf16.mxu0 0
        %814 = vmatpush1.bf16.xpose.msra.mxu0 0
        %815 = vmatprep.subr.bf16.mxu0 0
        %816 = vmatpush1.bf16.xpose.msra.mxu0 0
        %817 = vmatprep.subr.bf16.mxu0 0
        %818 = vmatpush1.bf16.xpose.msra.mxu0 0
        %819 = vmatprep.subr.bf16.mxu0 0
        %820 = vmatpush1.bf16.xpose.msra.mxu0 0
        %821 = vmatprep.subr.bf16.mxu0 0
        %822 = vmatpush1.bf16.xpose.msra.mxu0 0
        %823 = vmatprep.subr.bf16.mxu0 0
        %824 = vmatpush1.bf16.xpose.msra.mxu0 0
        %825 = vmatprep.mubr.bf16.mxu0 0
        %826 = vmatmul.mubr.bf16.gmra.mrb[0].mxu0 %v788
        %v827 = vpop.f32.mrb[0].mxu0
        %v828 = vadd.f32 0.0, %v827
        %v829 = vpop.f32.mrb[0].mxu0
        %v830 = vpop.f32.mrb[0].mxu0
        %v831 = vadd.f32 0.0, %v830
        %v832 = vpop.f32.mrb[0].mxu0
        %833 = vdwg.mxu0
        %v834 = vsel %vm537, %v828, -inf
        %835 = vmax.xlane.f32.xlu0 %v834
        %v836 = vpop.xlane.xlu0 %835
        %v837 = vsel %vm537, %v831, -inf
        %838 = vmax.xlane.f32.xlu0 %v837
        %v839 = vpop.xlane.xlu0 %838
        %v840 = vsub.f32 %v828, %v836
        %v841 = vsub.f32 %v831, %v839
        %v842 = vmul.f32 %v840, 1.442695
        %v843 = vpow.pop %v842
        %v844 = vmul.f32 %v841, 1.442695
        %v845 = vpow.pop %v844
        %v846 = vsel %vm537, %v843, 0.0
        %847 = vadd.xlane.f32.xlu0 %v846
        %v848 = vpop.xlane.xlu0 %847
        %v849 = vsel %vm537, %v845, 0.0
        %850 = vadd.xlane.f32.xlu0 %v849
        %v851 = vpop.xlane.xlu0 %850
        %v852 = vrcp.pop %v848
        %v853 = vrcp.pop %v851
        %v854 = vmul.f32 %v843, %v852
        %v855 = vmul.f32 %v845, %v853
        %v856 = vpack.c.bf16 %v855, %v854
        %857 = vrot.lane.b32.xlu0 %v536, 80
        %v858 = vpop.permute.xlu0 %857
        %v860 = vsel %vm537, %v856, 0
        %v863 = vsel %vm614, %v858, 0
        %865 = vmatprep.subr.bf16.mxu0 0
        %866 = vmatpush1.bf16.msra.mxu0 %v863
        %867 = vmatprep.subr.bf16.mxu0 0
        %868 = vmatpush1.bf16.msra.mxu0 0
        %869 = vmatprep.subr.bf16.mxu0 0
        %870 = vmatpush1.bf16.msra.mxu0 0
        %871 = vmatprep.subr.bf16.mxu0 0
        %872 = vmatpush1.bf16.msra.mxu0 0
        %873 = vmatprep.subr.bf16.mxu0 0
        %874 = vmatpush1.bf16.msra.mxu0 0
        %875 = vmatprep.subr.bf16.mxu0 0
        %876 = vmatpush1.bf16.msra.mxu0 0
        %877 = vmatprep.subr.bf16.mxu0 0
        %878 = vmatpush1.bf16.msra.mxu0 0
        %879 = vmatprep.subr.bf16.mxu0 0
        %880 = vmatpush1.bf16.msra.mxu0 0
        %881 = vmatprep.subr.bf16.mxu0 0
        %882 = vmatpush1.bf16.msra.mxu0 0
        %883 = vmatprep.subr.bf16.mxu0 0
        %884 = vmatpush1.bf16.msra.mxu0 0
        %885 = vmatprep.subr.bf16.mxu0 0
        %886 = vmatpush1.bf16.msra.mxu0 0
        %887 = vmatprep.subr.bf16.mxu0 0
        %888 = vmatpush1.bf16.msra.mxu0 0
        %889 = vmatprep.subr.bf16.mxu0 0
        %890 = vmatpush1.bf16.msra.mxu0 0
        %891 = vmatprep.subr.bf16.mxu0 0
        %892 = vmatpush1.bf16.msra.mxu0 0
        %893 = vmatprep.subr.bf16.mxu0 0
        %894 = vmatpush1.bf16.msra.mxu0 0
        %895 = vmatprep.subr.bf16.mxu0 0
        %896 = vmatpush1.bf16.msra.mxu0 0
        %897 = vmatprep.mubr.bf16.mxu0 0
        %898 = vmatmul.mubr.bf16.gmra.mrb[0].mxu0 %v860
        %v899 = vpop.f32.mrb[0].mxu0
        %v900 = vadd.f32 0.0, %v899
        %v901 = vpop.f32.mrb[0].mxu0
        %v902 = vpop.f32.mrb[0].mxu0
        %v903 = vadd.f32 0.0, %v902
        %v904 = vpop.f32.mrb[0].mxu0
        %905 = vdwg.mxu0
        %906 = vrot.lane.b32.xlu0 %v535, 104
        %v907 = vpop.permute.xlu0 %906
        %908 = vrot.lane.b32.xlu0 %v536, 104
        %v909 = vpop.permute.xlu0 %908
        %v911 = vsel %vm537, %v907, 0
        %v914 = vsel %vm537, %v909, 0
        %916 = vmatprep.subr.bf16.mxu0 0
        %917 = vmatpush1.bf16.xpose.msra.mxu0 %v914
        %918 = vmatprep.subr.bf16.mxu0 0
        %919 = vmatpush1.bf16.xpose.msra.mxu0 0
        %920 = vmatprep.subr.bf16.mxu0 0
        %921 = vmatpush1.bf16.xpose.msra.mxu0 0
        %922 = vmatprep.subr.bf16.mxu0 0
        %923 = vmatpush1.bf16.xpose.msra.mxu0 0
        %924 = vmatprep.subr.bf16.mxu0 0
        %925 = vmatpush1.bf16.xpose.msra.mxu0 0
        %926 = vmatprep.subr.bf16.mxu0 0
        %927 = vmatpush1.bf16.xpose.msra.mxu0 0
        %928 = vmatprep.subr.bf16.mxu0 0
        %929 = vmatpush1.bf16.xpose.msra.mxu0 0
        %930 = vmatprep.subr.bf16.mxu0 0
        %931 = vmatpush1.bf16.xpose.msra.mxu0 0
        %932 = vmatprep.subr.bf16.mxu0 0
        %933 = vmatpush1.bf16.xpose.msra.mxu0 0
        %934 = vmatprep.subr.bf16.mxu0 0
        %935 = vmatpush1.bf16.xpose.msra.mxu0 0
        %936 = vmatprep.subr.bf16.mxu0 0
        %937 = vmatpush1.bf16.xpose.msra.mxu0 0
        %938 = vmatprep.subr.bf16.mxu0 0
        %939 = vmatpush1.bf16.xpose.msra.mxu0 0
        %940 = vmatprep.subr.bf16.mxu0 0
        %941 = vmatpush1.bf16.xpose.msra.mxu0 0
        %942 = vmatprep.subr.bf16.mxu0 0
        %943 = vmatpush1.bf16.xpose.msra.mxu0 0
        %944 = vmatprep.subr.bf16.mxu0 0
        %945 = vmatpush1.bf16.xpose.msra.mxu0 0
        %946 = vmatprep.subr.bf16.mxu0 0
        %947 = vmatpush1.bf16.xpose.msra.mxu0 0
        %948 = vmatprep.mubr.bf16.mxu0 0
        %949 = vmatmul.mubr.bf16.gmra.mrb[0].mxu0 %v911
        %v950 = vpop.f32.mrb[0].mxu0
        %v951 = vadd.f32 0.0, %v950
        %v952 = vpop.f32.mrb[0].mxu0
        %v953 = vpop.f32.mrb[0].mxu0
        %v954 = vadd.f32 0.0, %v953
        %v955 = vpop.f32.mrb[0].mxu0
        %956 = vdwg.mxu0
        %v957 = vsel %vm537, %v951, -inf
        %958 = vmax.xlane.f32.xlu0 %v957
        %v959 = vpop.xlane.xlu0 %958
        %v960 = vsel %vm537, %v954, -inf
        %961 = vmax.xlane.f32.xlu0 %v960
        %v962 = vpop.xlane.xlu0 %961
        %v963 = vsub.f32 %v951, %v959
        %v964 = vsub.f32 %v954, %v962
        %v965 = vmul.f32 %v963, 1.442695
        %v966 = vpow.pop %v965
        %v967 = vmul.f32 %v964, 1.442695
        %v968 = vpow.pop %v967
        %v969 = vsel %vm537, %v966, 0.0
        %970 = vadd.xlane.f32.xlu0 %v969
        %v971 = vpop.xlane.xlu0 %970
        %v972 = vsel %vm537, %v968, 0.0
        %973 = vadd.xlane.f32.xlu0 %v972
        %v974 = vpop.xlane.xlu0 %973
        %v975 = vrcp.pop %v971
        %v976 = vrcp.pop %v974
        %v977 = vmul.f32 %v966, %v975
        %v978 = vmul.f32 %v968, %v976
        %v979 = vpack.c.bf16 %v978, %v977
        %980 = vrot.lane.b32.xlu0 %v536, 72
        %v981 = vpop.permute.xlu0 %980
        %v983 = vsel %vm537, %v979, 0
        %v986 = vsel %vm614, %v981, 0
        %988 = vmatprep.subr.bf16.mxu0 0
        %989 = vmatpush1.bf16.msra.mxu0 %v986
        %990 = vmatprep.subr.bf16.mxu0 0
        %991 = vmatpush1.bf16.msra.mxu0 0
        %992 = vmatprep.subr.bf16.mxu0 0
        %993 = vmatpush1.bf16.msra.mxu0 0
        %994 = vmatprep.subr.bf16.mxu0 0
        %995 = vmatpush1.bf16.msra.mxu0 0
        %996 = vmatprep.subr.bf16.mxu0 0
        %997 = vmatpush1.bf16.msra.mxu0 0
        %998 = vmatprep.subr.bf16.mxu0 0
        %999 = vmatpush1.bf16.msra.mxu0 0
        %1000 = vmatprep.subr.bf16.mxu0 0
        %1001 = vmatpush1.bf16.msra.mxu0 0
        %1002 = vmatprep.subr.bf16.mxu0 0
        %1003 = vmatpush1.bf16.msra.mxu0 0
        %1004 = vmatprep.subr.bf16.mxu0 0
        %1005 = vmatpush1.bf16.msra.mxu0 0
        %1006 = vmatprep.subr.bf16.mxu0 0
        %1007 = vmatpush1.bf16.msra.mxu0 0
        %1008 = vmatprep.subr.bf16.mxu0 0
        %1009 = vmatpush1.bf16.msra.mxu0 0
        %1010 = vmatprep.subr.bf16.mxu0 0
        %1011 = vmatpush1.bf16.msra.mxu0 0
        %1012 = vmatprep.subr.bf16.mxu0 0
        %1013 = vmatpush1.bf16.msra.mxu0 0
        %1014 = vmatprep.subr.bf16.mxu0 0
        %1015 = vmatpush1.bf16.msra.mxu0 0
        %1016 = vmatprep.subr.bf16.mxu0 0
        %1017 = vmatpush1.bf16.msra.mxu0 0
        %1018 = vmatprep.subr.bf16.mxu0 0
        %1019 = vmatpush1.bf16.msra.mxu0 0
        %1020 = vmatprep.mubr.bf16.mxu0 0
        %1021 = vmatmul.mubr.bf16.gmra.mrb[0].mxu0 %v983
        %v1022 = vpop.f32.mrb[0].mxu0
        %v1023 = vadd.f32 0.0, %v1022
        %v1024 = vpop.f32.mrb[0].mxu0
        %v1025 = vpop.f32.mrb[0].mxu0
        %v1026 = vadd.f32 0.0, %v1025
        %v1027 = vpop.f32.mrb[0].mxu0
        %1028 = vdwg.mxu0
        %1031 = vrot.lane.b32.xlu0 %v777, 8
        %v1032 = vpop.permute.xlu0 %1031
        %1033 = vrot.lane.b32.xlu0 %v780, 8
        %v1034 = vpop.permute.xlu0 %1033
        %1039 = vrot.lane.b32.xlu0 %v900, 16
        %v1040 = vpop.permute.xlu0 %1039
        %1041 = vrot.lane.b32.xlu0 %v903, 16
        %v1042 = vpop.permute.xlu0 %1041
        %1047 = vrot.lane.b32.xlu0 %v1023, 24
        %v1048 = vpop.permute.xlu0 %1047
        %1049 = vrot.lane.b32.xlu0 %v1026, 24
        %v1050 = vpop.permute.xlu0 %1049
        %v1053 = vsel %vm537, %v653, %v1032
        %v1054 = vsel %vm537, %v656, %v1034
        %vm1055 = vcmask 130048
        %v1056 = vsel %vm1055, %v1053, %v1040
        %v1057 = vsel %vm1055, %v1054, %v1042
        %vm1058 = vcmask 195584
        %v1059 = vsel %vm1058, %v1056, %v1048
        %v1060 = vsel %vm1058, %v1057, %v1050
        %v1061 = vpack.c.bf16 %v1060, %v1059
        %v1062 = vld [vmem:[#allocation7] sm:$0xf]
        %v1063 = vld [vmem:[#allocation7 + $0x4] sm:$0xf]
        %v1064 = vld [vmem:[#allocation7 + $0x8] sm:$0xf]
        %v1065 = vld [vmem:[#allocation7 + $0xc] sm:$0xf]
        %v1070 = vunpack.c.l.b16 %v1062
        %v1071 = vunpack.c.l.b16 %v1063
        %v1072 = vunpack.c.l.b16 %v1064
        %v1073 = vunpack.c.l.b16 %v1065
        %v1074 = vpack.c.b16 %v1071, %v1070
        %v1075 = vpack.c.b16 %v1073, %v1072
        %v1079 = vsel %vm425, %v1061, 0
        %1081 = vmatprep.subr.bf16.mxu0 0
        %1082 = vmatpush1.bf16.msra.mxu0 %v1074
        %1083 = vmatprep.subr.bf16.mxu0 0
        %1084 = vmatpush1.bf16.msra.mxu0 %v1075
        %1085 = vmatprep.subr.bf16.mxu0 0
        %1086 = vmatpush1.bf16.msra.mxu0 0
        %1087 = vmatprep.subr.bf16.mxu0 0
        %1088 = vmatpush1.bf16.msra.mxu0 0
        %1089 = vmatprep.subr.bf16.mxu0 0
        %1090 = vmatpush1.bf16.msra.mxu0 0
        %1091 = vmatprep.subr.bf16.mxu0 0
        %1092 = vmatpush1.bf16.msra.mxu0 0
        %1093 = vmatprep.subr.bf16.mxu0 0
        %1094 = vmatpush1.bf16.msra.mxu0 0
        %1095 = vmatprep.subr.bf16.mxu0 0
        %1096 = vmatpush1.bf16.msra.mxu0 0
        %1097 = vmatprep.subr.bf16.mxu0 0
        %1098 = vmatpush1.bf16.msra.mxu0 0
        %1099 = vmatprep.subr.bf16.mxu0 0
        %1100 = vmatpush1.bf16.msra.mxu0 0
        %1101 = vmatprep.subr.bf16.mxu0 0
        %1102 = vmatpush1.bf16.msra.mxu0 0
        %1103 = vmatprep.subr.bf16.mxu0 0
        %1104 = vmatpush1.bf16.msra.mxu0 0
        %1105 = vmatprep.subr.bf16.mxu0 0
        %1106 = vmatpush1.bf16.msra.mxu0 0
        %1107 = vmatprep.subr.bf16.mxu0 0
        %1108 = vmatpush1.bf16.msra.mxu0 0
        %1109 = vmatprep.subr.bf16.mxu0 0
        %1110 = vmatpush1.bf16.msra.mxu0 0
        %1111 = vmatprep.subr.bf16.mxu0 0
        %1112 = vmatpush1.bf16.msra.mxu0 0
        %1113 = vmatprep.mubr.bf16.mxu0 0
        %1114 = vmatmul.mubr.bf16.gmra.mrb[0].mxu0 %v1079
        %v1115 = vpop.f32.mrb[0].mxu0
        %v1116 = vadd.f32 0.0, %v1115
        %v1117 = vpop.f32.mrb[0].mxu0
        %v1118 = vpop.f32.mrb[0].mxu0
        %v1119 = vadd.f32 0.0, %v1118
        %v1120 = vpop.f32.mrb[0].mxu0
        %1121 = vdwg.mxu0
        %v1122 = vadd.f32 %v400, %v1116
        %v1123 = vadd.f32 %v401, %v1119
        %v1124 = vlaneseq
        %v1125 = vshrl.u32 %v1124, 7
        %v1126 = vsub.s32 2, %v1125
        %v1127 = vrot.slane %v398, %v1126
        %v1128 = vadd.f32 %v1122, %v1127
        %v1129 = vadd.f32 %v1123, %v1127
        %v1130 = vsel %vm425, %v1128, 0.0
        %1131 = vadd.xlane.f32.xlu0 %v1130
        %v1132 = vpop.xlane.xlu0 %1131
        %v1133 = vsel %vm425, %v1129, 0.0
        %1134 = vadd.xlane.f32.xlu0 %v1133
        %v1135 = vpop.xlane.xlu0 %1134
        %v1136 = vmul.f32 %v1132, 0.03125
        %v1137 = vmul.f32 %v1135, 0.03125
        %v1138 = vmul.f32 %v1128, %v1128
        %v1139 = vmul.f32 %v1129, %v1129
        %v1140 = vsel %vm425, %v1138, 0.0
        %1141 = vadd.xlane.f32.xlu0 %v1140
        %v1142 = vpop.xlane.xlu0 %1141
        %v1143 = vsel %vm425, %v1139, 0.0
        %1144 = vadd.xlane.f32.xlu0 %v1143
        %v1145 = vpop.xlane.xlu0 %1144
        %v1146 = vmul.f32 %v1142, 0.03125
        %v1147 = vmul.f32 %v1145, 0.03125
        %v1148 = vmul.f32 %v1136, %v1136
        %v1149 = vmul.f32 %v1137, %v1137
        %v1150 = vsub.f32 %v1146, %v1148
        %v1151 = vsub.f32 %v1147, %v1149
        %v1152 = vsub.f32 %v1128, %v1136
        %v1153 = vsub.f32 %v1129, %v1137
        %v1154 = vadd.f32 %v1150, 1e-05
        %v1155 = vadd.f32 %v1151, 1e-05
        %v1156 = vrsqrt.pop %v1154
        %v1157 = vrsqrt.pop %v1155
        %v1158 = vmul.f32 %v1152, %v1156
        %v1159 = vmul.f32 %v1153, %v1157
        %v1160 = vlaneseq
        %v1161 = vshrl.u32 %v1160, 7
        %v1162 = vsub.s32 5, %v1161
        %v1163 = vrot.slane %v398, %v1162
        %v1164 = vmul.f32 %v1158, %v1163
        %v1165 = vmul.f32 %v1159, %v1163
        %v1166 = vlaneseq
        %v1167 = vshrl.u32 %v1166, 7
        %v1168 = vsub.s32 6, %v1167
        %v1169 = vrot.slane %v398, %v1168
        %v1170 = vadd.f32 %v1164, %v1169
        %v1171 = vadd.f32 %v1165, %v1169
        %v1172 = vpack.c.bf16 %v1171, %v1170
        %v1173 = vld [vmem:[#allocation8] sm:$0xf]
        %v1174 = vld [vmem:[#allocation8 + $0x4] sm:$0xf]
        %v1175 = vld [vmem:[#allocation8 + $0x8] sm:$0xf]
        %v1176 = vld [vmem:[#allocation8 + $0xc] sm:$0xf]
        %v1177 = vlaneseq
        %v1178 = vshrl.u32 %v1177, 7
        %v1179 = vsub.s32 3, %v1178
        %v1180 = vrot.slane %v398, %v1179
        %v1185 = vunpack.c.l.b16 %v1173
        %v1186 = vunpack.c.l.b16 %v1174
        %v1187 = vunpack.c.l.b16 %v1175
        %v1188 = vunpack.c.l.b16 %v1176
        %v1189 = vpack.c.b16 %v1186, %v1185
        %v1190 = vpack.c.b16 %v1188, %v1187
        %v1194 = vsel %vm425, %v1172, 0
        %1196 = vmatprep.subr.bf16.mxu0 0
        %1197 = vmatpush1.bf16.msra.mxu0 %v1189
        %1198 = vmatprep.subr.bf16.mxu0 0
        %1199 = vmatpush1.bf16.msra.mxu0 %v1190
        %1200 = vmatprep.subr.bf16.mxu0 0
        %1201 = vmatpush1.bf16.msra.mxu0 0
        %1202 = vmatprep.subr.bf16.mxu0 0
        %1203 = vmatpush1.bf16.msra.mxu0 0
        %1204 = vmatprep.subr.bf16.mxu0 0
        %1205 = vmatpush1.bf16.msra.mxu0 0
        %1206 = vmatprep.subr.bf16.mxu0 0
        %1207 = vmatpush1.bf16.msra.mxu0 0
        %1208 = vmatprep.subr.bf16.mxu0 0
        %1209 = vmatpush1.bf16.msra.mxu0 0
        %1210 = vmatprep.subr.bf16.mxu0 0
        %1211 = vmatpush1.bf16.msra.mxu0 0
        %1212 = vmatprep.subr.bf16.mxu0 0
        %1213 = vmatpush1.bf16.msra.mxu0 0
        %1214 = vmatprep.subr.bf16.mxu0 0
        %1215 = vmatpush1.bf16.msra.mxu0 0
        %1216 = vmatprep.subr.bf16.mxu0 0
        %1217 = vmatpush1.bf16.msra.mxu0 0
        %1218 = vmatprep.subr.bf16.mxu0 0
        %1219 = vmatpush1.bf16.msra.mxu0 0
        %1220 = vmatprep.subr.bf16.mxu0 0
        %1221 = vmatpush1.bf16.msra.mxu0 0
        %1222 = vmatprep.subr.bf16.mxu0 0
        %1223 = vmatpush1.bf16.msra.mxu0 0
        %1224 = vmatprep.subr.bf16.mxu0 0
        %1225 = vmatpush1.bf16.msra.mxu0 0
        %1226 = vmatprep.subr.bf16.mxu0 0
        %1227 = vmatpush1.bf16.msra.mxu0 0
        %1228 = vmatprep.mubr.bf16.mxu0 0
        %1229 = vmatmul.mubr.bf16.gmra.mrb[0].mxu0 %v1194
        %v1230 = vpop.f32.mrb[0].mxu0
        %v1231 = vadd.f32 %v1180, %v1230
        %v1232 = vpop.f32.mrb[0].mxu0
        %v1233 = vpop.f32.mrb[0].mxu0
        %v1234 = vadd.f32 %v1180, %v1233
        %v1235 = vpop.f32.mrb[0].mxu0
        %1236 = vdwg.mxu0
        %v1237 = vmax.f32 %v1231, 0.0
        %v1238 = vmax.f32 %v1234, 0.0
        %v1239 = vpack.c.bf16 %v1238, %v1237
        %v1240 = vld [vmem:[%s6] sm:$0xf]
        %v1241 = vld [vmem:[%s6 + $0x4] sm:$0xf]
        %v1242 = vld [vmem:[%s6 + $0x8] sm:$0xf]
        %v1243 = vld [vmem:[%s6 + $0xc] sm:$0xf]
        %v1244 = vld [vmem:[%s6 + $0x10] sm:$0xf]
        %v1245 = vld [vmem:[%s6 + $0x14] sm:$0xf]
        %v1246 = vld [vmem:[%s6 + $0x18] sm:$0xf]
        %v1247 = vld [vmem:[%s6 + $0x1c] sm:$0xf]
        %v1256 = vunpack.c.l.b16 %v1240
        %v1257 = vunpack.c.l.b16 %v1241
        %v1258 = vunpack.c.l.b16 %v1242
        %v1259 = vunpack.c.l.b16 %v1243
        %v1260 = vunpack.c.l.b16 %v1244
        %v1261 = vunpack.c.l.b16 %v1245
        %v1262 = vunpack.c.l.b16 %v1246
        %v1263 = vunpack.c.l.b16 %v1247
        %v1264 = vpack.c.b16 %v1257, %v1256
        %v1265 = vpack.c.b16 %v1259, %v1258
        %v1266 = vpack.c.b16 %v1261, %v1260
        %v1267 = vpack.c.b16 %v1263, %v1262
        %vm1272 = vcmask 523264
        %v1274 = vsel %vm1272, %v1239, 0
        %1276 = vmatprep.subr.bf16.mxu0 0
        %1277 = vmatpush1.bf16.msra.mxu0 %v1264
        %1278 = vmatprep.subr.bf16.mxu0 0
        %1279 = vmatpush1.bf16.msra.mxu0 %v1265
        %1280 = vmatprep.subr.bf16.mxu0 0
        %1281 = vmatpush1.bf16.msra.mxu0 %v1266
        %1282 = vmatprep.subr.bf16.mxu0 0
        %1283 = vmatpush1.bf16.msra.mxu0 %v1267
        %1284 = vmatprep.subr.bf16.mxu0 0
        %1285 = vmatpush1.bf16.msra.mxu0 0
        %1286 = vmatprep.subr.bf16.mxu0 0
        %1287 = vmatpush1.bf16.msra.mxu0 0
        %1288 = vmatprep.subr.bf16.mxu0 0
        %1289 = vmatpush1.bf16.msra.mxu0 0
        %1290 = vmatprep.subr.bf16.mxu0 0
        %1291 = vmatpush1.bf16.msra.mxu0 0
        %1292 = vmatprep.subr.bf16.mxu0 0
        %1293 = vmatpush1.bf16.msra.mxu0 0
        %1294 = vmatprep.subr.bf16.mxu0 0
        %1295 = vmatpush1.bf16.msra.mxu0 0
        %1296 = vmatprep.subr.bf16.mxu0 0
        %1297 = vmatpush1.bf16.msra.mxu0 0
        %1298 = vmatprep.subr.bf16.mxu0 0
        %1299 = vmatpush1.bf16.msra.mxu0 0
        %1300 = vmatprep.subr.bf16.mxu0 0
        %1301 = vmatpush1.bf16.msra.mxu0 0
        %1302 = vmatprep.subr.bf16.mxu0 0
        %1303 = vmatpush1.bf16.msra.mxu0 0
        %1304 = vmatprep.subr.bf16.mxu0 0
        %1305 = vmatpush1.bf16.msra.mxu0 0
        %1306 = vmatprep.subr.bf16.mxu0 0
        %1307 = vmatpush1.bf16.msra.mxu0 0
        %1308 = vmatprep.mubr.bf16.mxu0 0
        %1309 = vmatmul.mubr.bf16.gmra.mrb[0].mxu0 %v1274
        %v1310 = vpop.f32.mrb[0].mxu0
        %v1311 = vadd.f32 0.0, %v1310
        %v1312 = vpop.f32.mrb[0].mxu0
        %v1313 = vpop.f32.mrb[0].mxu0
        %v1314 = vadd.f32 0.0, %v1313
        %v1315 = vpop.f32.mrb[0].mxu0
        %1316 = vdwg.mxu0
        %v1317 = vadd.f32 %v1170, %v1311
        %v1318 = vadd.f32 %v1171, %v1314
        %v1319 = vlaneseq
        %v1320 = vshrl.u32 %v1319, 7
        %v1321 = vsub.s32 4, %v1320
        %v1322 = vrot.slane %v398, %v1321
        %v1323 = vadd.f32 %v1317, %v1322
        %v1324 = vadd.f32 %v1318, %v1322
        %v1325 = vsel %vm425, %v1323, 0.0
        %1326 = vadd.xlane.f32.xlu0 %v1325
        %v1327 = vpop.xlane.xlu0 %1326
        %v1328 = vsel %vm425, %v1324, 0.0
        %1329 = vadd.xlane.f32.xlu0 %v1328
        %v1330 = vpop.xlane.xlu0 %1329
        %v1331 = vmul.f32 %v1327, 0.03125
        %v1332 = vmul.f32 %v1330, 0.03125
        %v1333 = vmul.f32 %v1323, %v1323
        %v1334 = vmul.f32 %v1324, %v1324
        %v1335 = vsel %vm425, %v1333, 0.0
        %1336 = vadd.xlane.f32.xlu0 %v1335
        %v1337 = vpop.xlane.xlu0 %1336
        %v1338 = vsel %vm425, %v1334, 0.0
        %1339 = vadd.xlane.f32.xlu0 %v1338
        %v1340 = vpop.xlane.xlu0 %1339
        %v1341 = vmul.f32 %v1337, 0.03125
        %v1342 = vmul.f32 %v1340, 0.03125
        %v1343 = vmul.f32 %v1331, %v1331
        %v1344 = vmul.f32 %v1332, %v1332
        %v1345 = vsub.f32 %v1341, %v1343
        %v1346 = vsub.f32 %v1342, %v1344
        %v1347 = vsub.f32 %v1323, %v1331
        %v1348 = vsub.f32 %v1324, %v1332
        %v1349 = vadd.f32 %v1345, 1e-05
        %v1350 = vadd.f32 %v1346, 1e-05
        %v1351 = vrsqrt.pop %v1349
        %v1352 = vrsqrt.pop %v1350
        %v1353 = vmul.f32 %v1347, %v1351
        %v1354 = vmul.f32 %v1348, %v1352
        %v1355 = vlaneseq
        %v1356 = vshrl.u32 %v1355, 7
        %v1357 = vsub.s32 7, %v1356
        %v1358 = vrot.slane %v398, %v1357
        %v1359 = vmul.f32 %v1353, %v1358
        %v1360 = vmul.f32 %v1354, %v1358
        %v1361 = vlaneseq
        %v1362 = vshrl.u32 %v1361, 7
        %v1363 = vsub.s32 0, %v1362
        %v1364 = vrot.slane %v399, %v1363
        %v1365 = vadd.f32 %v1359, %v1364
        %v1366 = vadd.f32 %v1360, %v1364
        %1367 = vst.msk [vmem:[%s385] sm:$0xff] %vm425, %v1365
        %1368 = vst.msk [vmem:[%s385 + $0x8] sm:$0xff] %vm425, %v1366
        %s1369 = sand.u32 %s211, 1
        %s1370 = scalar_lea.sflag [#allocation4], %s1369
        %s1371 = sand.u32 %s211, 1
        %s1372 = smul.addr %s1371, 16
        %s1373 = scalar_lea.vmem [#allocation11], %s1372
        // Predicated region
        $region73: #{tpu_custom_call.1} parent=51 // pred_check
          %p1374 = pneg %p221
        $region74: #{tpu_custom_call.1} parent=51 // pred_check_branch
          %1376 = sbr.rel (%p1374) target = $region76
        $region75: #{tpu_custom_call.1} parent=51 // pred_region
          %s1377 = smul.u32 2, %s25
          %s1379 = ssub.s32 256, 256
          %1380 = vsyncadd %s1370, %s1379
          %s1381 = smul.addr %s1377, 128
          %s1382 = scalar_lea.hbm %s8, %s1381
          %s1383 = sshll.u32 %s1373, 4
          %s1384 = int_to_ptr.vmem [resolvable:$true] %s1383
          %1389 = dma.vmem_to_hbm [thread:$0]  %s1384, 256, %s1382, %s1370, 128, 128, 8
        $region76: #{tpu_custom_call.1} parent=51 // pred_fallthru
          _
      $region52: #{tpu_custom_call.1} parent=5 // pred_fallthru
        _
      %p1390 = scmp.le.s32.totalorder 2, %s20
      // Predicated region
      $region77: #{tpu_custom_call.1} parent=5 // pred_check
        %p1391 = pneg %p1390
      $region78: #{tpu_custom_call.1} parent=5 // pred_check_branch
        %1393 = sbr.rel (%p1391) target = $region80
      $region79: #{tpu_custom_call.1} parent=5 // pred_region
        %s1394 = ssub.s32 %s20, 2
        // Predicated region
        $region81: #{tpu_custom_call.1} parent=79 // pred_check
          %p1395 = pneg %p227
        $region82: #{tpu_custom_call.1} parent=79 // pred_check_branch
          %1397 = sbr.rel (%p1395) target = $region84
        $region83: #{tpu_custom_call.1} parent=79 // pred_region
          %s1398 = sand.u32 %s212, 1
          %s1399 = scalar_lea.sflag [#allocation4], %s1398
          %s1400 = sand.u32 %s212, 1
          %s1401 = smul.addr %s1400, 16
          %s1402 = scalar_lea.vmem [#allocation11], %s1401
          %1403 = dma.done %s1399, 256
        $region84: #{tpu_custom_call.1} parent=79 // pred_fallthru
          _
      $region80: #{tpu_custom_call.1} parent=5 // pred_fallthru
        _
    $region6: #{tpu_custom_call.1} parent=1 // loop_footer
      %s24 = sadd.s32 1, %s20
    $region7: #{tpu_custom_call.1} parent=1 // loop_footer_branch
      %19 = sbr.rel target = $region3
    $region8: #{tpu_custom_call.1} parent=1 // loop_exit
      _
    %1404 = vsyncpa [#allocation3], 1
    %s1405 = scalar_lea.sflag [#allocation3], 1
    %1406 = vsyncpa %s1405, 1
    %1407 = vsyncpa [#allocation6], 1
    %1408 = vsyncpa [#allocation9], 1
    %1409 = vsyncpa [#allocation4], 1
    %s1410 = scalar_lea.sflag [#allocation4], 1
    %1411 = vsyncpa %s1410, 1

</llo_original>
